<compile_context>
chip_gen: v6e
topology: v6e:2x2x1
jax: 0.10.0
libtpu: 0.0.40
codegen_flags: <defaults>
</compile_context>

<pallas_src>
import functools
import math

import jax
import jax.numpy as jnp
from jax import lax
from jax.experimental import pallas as pl
from jax.experimental.pallas import tpu as pltpu


# ----------------------------------------------------------------------------
# In-kernel helpers (VPU/EUP math, f32)
# ----------------------------------------------------------------------------

def _gelu_exact(x):
    """Exact (erf-based) GELU matching torch.nn.GELU() defaults.

    erf via Abramowitz & Stegun 7.1.26; the inner divide is routed to the EUP
    with pl.reciprocal(approx=True) (EUP slot is otherwise idle here).
    """
    z = x * 0.7071067811865476
    az = jnp.abs(z)
    t = pl.reciprocal(1.0 + 0.3275911 * az, approx=True)
    poly = t * (0.254829592 + t * (-0.284496736 + t * (1.421413741
             + t * (-1.453152027 + t * 1.061405429))))
    erf_abs = 1.0 - poly * jnp.exp(-az * az)
    erf_z = jnp.where(z < 0.0, -erf_abs, erf_abs)
    return 0.5 * x * (1.0 + erf_z)


# ----------------------------------------------------------------------------
# Kernel 1/3: fused FeedForward (+ optional routing-score matvec)
#   grid = (row_tiles, hidden_tiles); hidden axis is an accumulator ("arbitrary")
# ----------------------------------------------------------------------------

def _ff_kernel(*refs, emit_scores):
    if emit_scores:
        (x_ref, g_ref, w1_ref, b1_ref, w2_ref, b2_ref, rt_ref,
         o_ref, s_ref, xn_ref, acc_ref) = refs
    else:
        (x_ref, g_ref, w1_ref, b1_ref, w2_ref, b2_ref,
         o_ref, xn_ref, acc_ref) = refs
        rt_ref = s_ref = None

    h = pl.program_id(1)

    @pl.when(h == 0)
    def _():
        x = x_ref[...]                                         # (tile, dim) f32
        if emit_scores:
            # routing score on the raw activations while they sit in VMEM:
            # s[row] = <x[row, :], routing_token>  -> (tile, 1)
            s_ref[...] = lax.dot_general(
                x, rt_ref[...], (((1,), (1,)), ((), ())),
                preferred_element_type=jnp.float32)
        # RMSNorm: F.normalize(x, -1) * sqrt(dim) * gamma; gamma is pre-scaled
        # by sqrt(dim) in the wrapper.  rsqrt on the EUP (accurate path).
        ss = jnp.sum(x * x, axis=-1, keepdims=True)
        inv_norm = lax.rsqrt(jnp.maximum(ss, 1e-24))
        xn_ref[...] = (x * inv_norm * g_ref[...]).astype(jnp.bfloat16)
        acc_ref[...] = jnp.zeros_like(acc_ref)

    # Linear -> GELU -> partial Linear over this hidden tile; bf16 MXU operands,
    # f32 accumulation into the resident scratch.
    hdn = jnp.dot(xn_ref[...], w1_ref[...],
                  preferred_element_type=jnp.float32) + b1_ref[...]
    hdn = _gelu_exact(hdn)
    acc_ref[...] += jnp.dot(hdn.astype(jnp.bfloat16), w2_ref[...],
                            preferred_element_type=jnp.float32)

    @pl.when(h == pl.num_programs(1) - 1)
    def _():
        o_ref[...] = acc_ref[...] + b2_ref[...]


def _row_tile(rows):
    """Row tile (multiple of 8 or == rows).

    Prefers a tile dividing `rows` exactly (no pad / ragged block) with >=2 grid
    steps so v7x's second TensorCore gets work; falls back to 256-row ragged
    tiling for large awkward row counts.
    """
    if rows <= 256:
        for cand in (128, 64, 32, 16, 8):
            if rows % cand == 0 and rows // cand >= 2:
                return cand
        return rows
    for cand in (512, 256, 128):
        if rows % cand == 0:
            return cand
    return 256


def _hidden_tile(hidden):
    """Hidden tile: multiple of 128 dividing hidden (or the full hidden)."""
    if hidden % 128 != 0 or hidden <= 512:
        return hidden
    for cand in (512, 256, 128):
        if hidden % cand == 0:
            return cand
    return hidden


def _ff_vmem_limit(tile, dim, h_tile):
    act = tile * dim * 4                          # x / out f32 tiles
    weights = 2 * dim * h_tile * 2                # w1 + w2 bf16 tiles
    scratch = tile * dim * 6 + tile * h_tile * 4  # acc f32 + xn bf16 + hidden interm.
    est = 2 * (2 * act) + 2 * weights + scratch + (1 << 20)
    return int(min(max(2 * est, 16 << 20), 64 << 20))


def fused_feedforward(x2d, gamma_scaled, w1_bf16, b1, w2_bf16, b2,
                      routing_token=None):
    """x2d: (rows, dim) f32 -> ((rows, dim) f32, (rows, 1) f32 scores or None)."""
    rows, dim = x2d.shape
    hidden = w1_bf16.shape[1]
    tile = _row_tile(rows)
    h_tile = _hidden_tile(hidden)
    n_row = pl.cdiv(rows, tile)
    n_hid = hidden // h_tile
    emit_scores = routing_token is not None

    in_specs = [
        pl.BlockSpec((tile, dim), lambda i, h: (i, 0)),     # x (invariant over h)
        pl.BlockSpec((1, dim), lambda i, h: (0, 0)),        # gamma * sqrt(dim)
        pl.BlockSpec((dim, h_tile), lambda i, h: (0, h)),   # w1 bf16 (N-tiled)
        pl.BlockSpec((1, h_tile), lambda i, h: (0, h)),     # b1
        pl.BlockSpec((h_tile, dim), lambda i, h: (h, 0)),   # w2 bf16 (K-tiled)
        pl.BlockSpec((1, dim), lambda i, h: (0, 0)),        # b2
    ]
    args = [x2d, gamma_scaled, w1_bf16, b1, w2_bf16, b2]
    out_shapes = [jax.ShapeDtypeStruct((rows, dim), jnp.float32)]
    out_specs = [pl.BlockSpec((tile, dim), lambda i, h: (i, 0))]
    if emit_scores:
        in_specs.append(pl.BlockSpec((1, dim), lambda i, h: (0, 0)))
        args.append(routing_token)
        out_shapes.append(jax.ShapeDtypeStruct((rows, 1), jnp.float32))
        out_specs.append(pl.BlockSpec((tile, 1), lambda i, h: (i, 0)))

    kern = functools.partial(_ff_kernel, emit_scores=emit_scores)
    outs = pl.pallas_call(
        kern,
        out_shape=tuple(out_shapes),
        grid=(n_row, n_hid),
        in_specs=in_specs,
        out_specs=tuple(out_specs),
        scratch_shapes=[pltpu.VMEM((tile, dim), jnp.bfloat16),   # xn (RMS-normed, bf16)
                        pltpu.VMEM((tile, dim), jnp.float32)],   # f32 accumulator
        compiler_params=pltpu.CompilerParams(
            dimension_semantics=("parallel", "arbitrary"),
            vmem_limit_bytes=_ff_vmem_limit(tile, dim, h_tile)),
    )(*args)
    if emit_scores:
        return outs[0], outs[1]
    return outs[0], None


# ----------------------------------------------------------------------------
# Kernel 2/3: coordinate-descent on the precomputed (b, n) scores
#   (all batches per grid step -> sublane-dense; body unrolled x2)
# ----------------------------------------------------------------------------

def _coor_descent_kernel(s_ref, o_ref, *, n_iters, eps, logk):
    s = s_ref[...]                                             # (bt, n) f32
    inv_eps = 1.0 / eps

    def step(carry):
        a, bb = carry
        sb = (s + bb) * inv_eps
        m = jnp.max(sb, axis=-1, keepdims=True)
        lse = m + jnp.log(jnp.sum(jnp.exp(sb - m), axis=-1, keepdims=True))
        a = eps * (logk - lse)
        bb = -jnp.maximum(s + a, 0.0)
        return a, bb

    def body(_, carry):                                        # manual 2x unroll
        return step(step(carry))

    carry = (jnp.zeros((s.shape[0], 1), jnp.float32), -s)
    carry = lax.fori_loop(0, n_iters // 2, body, carry)
    if n_iters % 2:
        carry = step(carry)
    a, bb = carry
    o_ref[...] = jnp.exp((s + a + bb) * inv_eps)


def coor_descent_scores(raw_scores, *, n_iters, eps, k):
    """raw_scores: (b, n) f32 -> coor-descent scores (b, n) f32."""
    b, n = raw_scores.shape
    bt = b
    if b > 256 and b % 8 == 0:
        for cand in (256, 128, 64, 32, 16, 8):
            if b % cand == 0:
                bt = cand
                break
    kern = functools.partial(_coor_descent_kernel, n_iters=n_iters,
                             eps=float(eps), logk=float(math.log(k)))
    return pl.pallas_call(
        kern,
        out_shape=jax.ShapeDtypeStruct((b, n), jnp.float32),
        grid=(pl.cdiv(b, bt),),
        in_specs=[pl.BlockSpec((bt, n), lambda i: (i, 0))],
        out_specs=pl.BlockSpec((bt, n), lambda i: (i, 0)),
        compiler_params=pltpu.CompilerParams(
            dimension_semantics=("parallel",)),
    )(raw_scores)


# ----------------------------------------------------------------------------
# Module composition (top-k / gather / scatter-add route-back stay in XLA)
# ----------------------------------------------------------------------------

def conditional_routed_feedforward(x, params, *, num_heavy_tokens,
                                   n_iters=50, fetch_k_ratio=9.0 / 8.0, eps=1.0):
    b, n, dim = x.shape
    rows = b * n

    # Light feedforward over every token + fused routing-score matvec (1 call).
    light2d, score_col = fused_feedforward(
        x.reshape(rows, dim), params["light_gamma"], params["light_w1"],
        params["light_b1"], params["light_w2"], params["light_b2"],
        routing_token=params["routing_token"])
    light_out = light2d.reshape(b, n, dim)
    raw_scores = score_col.reshape(b, n)

    # Coordinate-descent router on the (b, n) scores (1 call).
    # TODO(synk): attention/padding-mask path (reference forward uses mask=None).
    effective_k = min(num_heavy_tokens * fetch_k_ratio, n)
    scores = coor_descent_scores(raw_scores, n_iters=n_iters, eps=eps,
                                 k=effective_k)
    sel_scores, sel_idx = lax.top_k(scores, num_heavy_tokens)
    # straight-through: forward value becomes exactly 1.0
    sel_scores = sel_scores + lax.stop_gradient(1.0 - sel_scores)

    batch_range = jnp.arange(b)[:, None]
    routed = x[batch_range, sel_idx].reshape(b * num_heavy_tokens, dim)

    # Heavy feedforward over routed tokens only (1 call).
    # TODO(synk): in-kernel gather via PrefetchScalarGridSpec + pl.Element and
    # input_output_aliases route-back (kept in XLA here).
    heavy2d, _ = fused_feedforward(
        routed, params["heavy_gamma"], params["heavy_w1"], params["heavy_b1"],
        params["heavy_w2"], params["heavy_b2"])
    routed_out = heavy2d.reshape(b, num_heavy_tokens, dim) * sel_scores[..., None]

    # route_back(zeros) + add  ==  single scatter-add (top-k indices are unique).
    return light_out.at[batch_range, sel_idx].add(routed_out)


# ----------------------------------------------------------------------------
# Parameter init (mirrors the PyTorch module) + one-time kernel-side preparation
# ----------------------------------------------------------------------------

def init_params(key, *, dim, light_mult=0.5, heavy_mult=4):
    light_hidden = int(dim * light_mult)
    heavy_hidden = int(dim * heavy_mult)
    ks = jax.random.split(key, 9)

    def lin_w(k, fan_in, fan_out):
        bound = 1.0 / math.sqrt(fan_in)
        return jax.random.uniform(k, (fan_in, fan_out), jnp.float32, -bound, bound)

    def lin_b(k, fan_in, fan_out):
        bound = 1.0 / math.sqrt(fan_in)
        return jax.random.uniform(k, (1, fan_out), jnp.float32, -bound, bound)

    return dict(
        routing_token=jax.random.normal(ks[0], (1, dim), jnp.float32),
        light_gamma=jnp.ones((1, dim), jnp.float32),
        light_w1=lin_w(ks[1], dim, light_hidden),
        light_b1=lin_b(ks[2], dim, light_hidden),
        light_w2=lin_w(ks[3], light_hidden, dim),
        light_b2=lin_b(ks[4], light_hidden, dim),
        heavy_gamma=jnp.ones((1, dim), jnp.float32),
        heavy_w1=lin_w(ks[5], dim, heavy_hidden),
        heavy_b1=lin_b(ks[6], dim, heavy_hidden),
        heavy_w2=lin_w(ks[7], heavy_hidden, dim),
        heavy_b2=lin_b(ks[8], heavy_hidden, dim),
    )


def prepare_params(p, dim):
    """One-time wrapper-side prep: bf16 matmul weights, gamma pre-scaled by sqrt(dim)."""
    sqrt_d = float(dim) ** 0.5
    return dict(
        routing_token=p["routing_token"].astype(jnp.float32),
        light_gamma=(p["light_gamma"] * sqrt_d).astype(jnp.float32),
        light_w1=p["light_w1"].astype(jnp.bfloat16),
        light_b1=p["light_b1"].astype(jnp.float32),
        light_w2=p["light_w2"].astype(jnp.bfloat16),
        light_b2=p["light_b2"].astype(jnp.float32),
        heavy_gamma=(p["heavy_gamma"] * sqrt_d).astype(jnp.float32),
        heavy_w1=p["heavy_w1"].astype(jnp.bfloat16),
        heavy_b1=p["heavy_b1"].astype(jnp.float32),
        heavy_w2=p["heavy_w2"].astype(jnp.bfloat16),
        heavy_b2=p["heavy_b2"].astype(jnp.float32),
    )


if __name__ == "__main__":
    dim = 32
    batch = 2
    seq = 64
    num_heavy_tokens = 8

    key = jax.random.PRNGKey(0)
    pkey, xkey = jax.random.split(key)
    raw_params = init_params(pkey, dim=dim, light_mult=0.5, heavy_mult=4)
    params = prepare_params(raw_params, dim)
    x = jax.random.normal(xkey, (batch, seq, dim), jnp.float32)

    fwd = jax.jit(functools.partial(conditional_routed_feedforward,
                                    num_heavy_tokens=num_heavy_tokens))
    out = fwd(x, params)
    jax.block_until_ready(out)
    assert out.shape == (batch, seq, dim)
    assert bool(jnp.all(jnp.isfinite(out)))
    print("KERNEL_OK")
</pallas_src>

<mosaic_0001>
module attributes {stable_mosaic.version = 11 : i64} {
  func.func @_ff_kernel(%arg0: i32, %arg1: i32, %arg2: memref<64x32xf32, #tpu.memory_space<vmem>>, %arg3: memref<1x32xf32, #tpu.memory_space<vmem>>, %arg4: memref<32x16xbf16, #tpu.memory_space<vmem>>, %arg5: memref<1x16xf32, #tpu.memory_space<vmem>>, %arg6: memref<16x32xbf16, #tpu.memory_space<vmem>>, %arg7: memref<1x32xf32, #tpu.memory_space<vmem>>, %arg8: memref<1x32xf32, #tpu.memory_space<vmem>>, %arg9: memref<64x32xf32, #tpu.memory_space<vmem>>, %arg10: memref<64x1xf32, #tpu.memory_space<vmem>>, %arg11: memref<64x32xbf16, #tpu.memory_space<vmem>>, %arg12: memref<64x32xf32, #tpu.memory_space<vmem>>) attributes {dimension_semantics = [#tpu.dimension_semantics<parallel>, #tpu.dimension_semantics<arbitrary>], iteration_bounds = array<i64: 2, 1>, scalar_prefetch = 0 : i64, scratch_operands = 2 : i64, tpu.core_type = #tpu.core_type<tc>, window_params = [{transform_indices = @transform_0, window_bounds = array<i64: 64, 32>}, {pipeline_mode = #tpu.pipeline_mode<synchronous>, transform_indices = @transform_1, window_bounds = array<i64: 1, 32>}, {transform_indices = @transform_2, window_bounds = array<i64: 32, 16>}, {transform_indices = @transform_3, window_bounds = array<i64: 1, 16>}, {transform_indices = @transform_4, window_bounds = array<i64: 16, 32>}, {pipeline_mode = #tpu.pipeline_mode<synchronous>, transform_indices = @transform_5, window_bounds = array<i64: 1, 32>}, {pipeline_mode = #tpu.pipeline_mode<synchronous>, transform_indices = @transform_6, window_bounds = array<i64: 1, 32>}, {transform_indices = @transform_7, window_bounds = array<i64: 64, 32>}, {transform_indices = @transform_8, window_bounds = array<i64: 64, 1>}]} {
    %c0_i32 = arith.constant 0 : i32
    %0 = arith.cmpi eq, %arg1, %c0_i32 : i32
    %1 = arith.extui %0 : i1 to i32
    %c0_i32_0 = arith.constant 0 : i32
    %2 = arith.cmpi ne, %1, %c0_i32_0 : i32
    scf.if %2 {
      %c0_29 = arith.constant 0 : index
      %c0_30 = arith.constant 0 : index
      %57 = vector.load %arg2[%c0_29, %c0_30] : memref<64x32xf32, #tpu.memory_space<vmem>>, vector<64x32xf32>
      %c0_31 = arith.constant 0 : index
      %c0_32 = arith.constant 0 : index
      %58 = vector.load %arg8[%c0_31, %c0_32] : memref<1x32xf32, #tpu.memory_space<vmem>>, vector<1x32xf32>
      %cst_33 = arith.constant dense<0.000000e+00> : vector<64x1xf32>
      %59 = tpu.matmul %57, %58, %cst_33 {dimension_numbers = #tpu.dot_dimension_numbers<[1], [1], [0], [0], [0, 0, 1, 0], [], []>} : vector<64x32xf32>, vector<1x32xf32>, vector<64x1xf32> -> vector<64x1xf32>
      %c0_34 = arith.constant 0 : index
      %c0_35 = arith.constant 0 : index
      %60 = vector.load %arg10[%c0_34, %c0_35] : memref<64x1xf32, #tpu.memory_space<vmem>>, vector<64x1xf32>
      tpu.vector_store %arg10[%c0_34, %c0_35], %59 {strides = array<i32>} : memref<64x1xf32, #tpu.memory_space<vmem>>, vector<64x1xf32>,
      %61 = arith.mulf %57, %57 : vector<64x32xf32>
      %cst_36 = arith.constant dense<0.000000e+00> : vector<64xf32>
      %62 = vector.multi_reduction <add>, %61, %cst_36 [1] : vector<64x32xf32> to vector<64xf32>
      %63 = vector.shape_cast %62 : vector<64xf32> to vector<64x1xf32>
      %cst_37 = arith.constant 1.000000e-24 : f32
      %64 = vector.broadcast %cst_37 : f32 to vector<64x1xf32>
      %65 = arith.maximumf %63, %64 : vector<64x1xf32>
      %66 = math.rsqrt %65 : vector<64x1xf32>
      %67 = vector.broadcast %66 : vector<64x1xf32> to vector<64x32xf32>
      %68 = arith.mulf %57, %67 : vector<64x32xf32>
      %c0_38 = arith.constant 0 : index
      %c0_39 = arith.constant 0 : index
      %69 = vector.load %arg3[%c0_38, %c0_39] : memref<1x32xf32, #tpu.memory_space<vmem>>, vector<1x32xf32>
      %70 = vector.broadcast %69 : vector<1x32xf32> to vector<64x32xf32>
      %71 = arith.mulf %68, %70 : vector<64x32xf32>
      %72 = arith.truncf %71 : vector<64x32xf32> to vector<64x32xbf16>
      %c0_40 = arith.constant 0 : index
      %c0_41 = arith.constant 0 : index
      %73 = vector.load %arg11[%c0_40, %c0_41] : memref<64x32xbf16, #tpu.memory_space<vmem>>, vector<64x32xbf16>
      tpu.vector_store %arg11[%c0_40, %c0_41], %72 {strides = array<i32>} : memref<64x32xbf16, #tpu.memory_space<vmem>>, vector<64x32xbf16>,
      %cst_42 = arith.constant 0.000000e+00 : f32
      %74 = vector.broadcast %cst_42 : f32 to vector<64x32xf32>
      %c0_43 = arith.constant 0 : index
      %c0_44 = arith.constant 0 : index
      %75 = vector.load %arg12[%c0_43, %c0_44] : memref<64x32xf32, #tpu.memory_space<vmem>>, vector<64x32xf32>
      tpu.vector_store %arg12[%c0_43, %c0_44], %74 {strides = array<i32>} : memref<64x32xf32, #tpu.memory_space<vmem>>, vector<64x32xf32>,
    } else {
    }
    %c0 = arith.constant 0 : index
    %c0_1 = arith.constant 0 : index
    %3 = vector.load %arg11[%c0, %c0_1] : memref<64x32xbf16, #tpu.memory_space<vmem>>, vector<64x32xbf16>
    %c0_2 = arith.constant 0 : index
    %c0_3 = arith.constant 0 : index
    %4 = vector.load %arg4[%c0_2, %c0_3] : memref<32x16xbf16, #tpu.memory_space<vmem>>, vector<32x16xbf16>
    %cst = arith.constant dense<0.000000e+00> : vector<64x16xf32>
    %5 = tpu.matmul %3, %4, %cst {dimension_numbers = #tpu.dot_dimension_numbers<[1], [0], [0], [1], [0, 0, 1, 1], [], []>} : vector<64x32xbf16>, vector<32x16xbf16>, vector<64x16xf32> -> vector<64x16xf32>
    %c0_4 = arith.constant 0 : index
    %c0_5 = arith.constant 0 : index
    %6 = vector.load %arg5[%c0_4, %c0_5] : memref<1x16xf32, #tpu.memory_space<vmem>>, vector<1x16xf32>
    %7 = vector.broadcast %6 : vector<1x16xf32> to vector<64x16xf32>
    %8 = arith.addf %5, %7 : vector<64x16xf32>
    %cst_6 = arith.constant 0.707106769 : f32
    %9 = vector.broadcast %cst_6 : f32 to vector<64x16xf32>
    %10 = arith.mulf %8, %9 : vector<64x16xf32>
    %11 = math.absf %10 : vector<64x16xf32>
    %cst_7 = arith.constant 0.327591091 : f32
    %12 = vector.broadcast %cst_7 : f32 to vector<64x16xf32>
    %13 = arith.mulf %12, %11 : vector<64x16xf32>
    %cst_8 = arith.constant 1.000000e+00 : f32
    %14 = vector.broadcast %cst_8 : f32 to vector<64x16xf32>
    %15 = arith.addf %14, %13 : vector<64x16xf32>
    %16 = tpu.reciprocal %15 {approx = true} : vector<64x16xf32> -> vector<64x16xf32>
    %cst_9 = arith.constant 1.06140542 : f32
    %17 = vector.broadcast %cst_9 : f32 to vector<64x16xf32>
    %18 = arith.mulf %16, %17 : vector<64x16xf32>
    %cst_10 = arith.constant -1.45315206 : f32
    %19 = vector.broadcast %cst_10 : f32 to vector<64x16xf32>
    %20 = arith.addf %19, %18 : vector<64x16xf32>
    %21 = arith.mulf %16, %20 : vector<64x16xf32>
    %cst_11 = arith.constant 1.42141378 : f32
    %22 = vector.broadcast %cst_11 : f32 to vector<64x16xf32>
    %23 = arith.addf %22, %21 : vector<64x16xf32>
    %24 = arith.mulf %16, %23 : vector<64x16xf32>
    %cst_12 = arith.constant -0.284496725 : f32
    %25 = vector.broadcast %cst_12 : f32 to vector<64x16xf32>
    %26 = arith.addf %25, %24 : vector<64x16xf32>
    %27 = arith.mulf %16, %26 : vector<64x16xf32>
    %cst_13 = arith.constant 0.254829586 : f32
    %28 = vector.broadcast %cst_13 : f32 to vector<64x16xf32>
    %29 = arith.addf %28, %27 : vector<64x16xf32>
    %30 = arith.mulf %16, %29 : vector<64x16xf32>
    %cst_14 = arith.constant 0.000000e+00 : f32
    %31 = vector.broadcast %cst_14 : f32 to vector<64x16xf32>
    %32 = arith.subf %31, %11 : vector<64x16xf32>
    %33 = arith.mulf %32, %11 : vector<64x16xf32>
    %34 = math.exp %33 : vector<64x16xf32>
    %35 = arith.mulf %30, %34 : vector<64x16xf32>
    %cst_15 = arith.constant 1.000000e+00 : f32
    %36 = vector.broadcast %cst_15 : f32 to vector<64x16xf32>
    %37 = arith.subf %36, %35 : vector<64x16xf32>
    %cst_16 = arith.constant 0.000000e+00 : f32
    %38 = vector.broadcast %cst_16 : f32 to vector<64x16xf32>
    %39 = arith.cmpf olt, %10, %38 : vector<64x16xf32>
    %cst_17 = arith.constant 0.000000e+00 : f32
    %40 = vector.broadcast %cst_17 : f32 to vector<64x16xf32>
    %41 = arith.subf %40, %37 : vector<64x16xf32>
    %42 = arith.select %39, %41, %37 : vector<64x16xi1>, vector<64x16xf32>
    %cst_18 = arith.constant 5.000000e-01 : f32
    %43 = vector.broadcast %cst_18 : f32 to vector<64x16xf32>
    %44 = arith.mulf %43, %8 : vector<64x16xf32>
    %cst_19 = arith.constant 1.000000e+00 : f32
    %45 = vector.broadcast %cst_19 : f32 to vector<64x16xf32>
    %46 = arith.addf %45, %42 : vector<64x16xf32>
    %47 = arith.mulf %44, %46 : vector<64x16xf32>
    %c0_20 = arith.constant 0 : index
    %c0_21 = arith.constant 0 : index
    %48 = vector.load %arg12[%c0_20, %c0_21] : memref<64x32xf32, #tpu.memory_space<vmem>>, vector<64x32xf32>
    %49 = arith.truncf %47 : vector<64x16xf32> to vector<64x16xbf16>
    %c0_22 = arith.constant 0 : index
    %c0_23 = arith.constant 0 : index
    %50 = vector.load %arg6[%c0_22, %c0_23] : memref<16x32xbf16, #tpu.memory_space<vmem>>, vector<16x32xbf16>
    %cst_24 = arith.constant dense<0.000000e+00> : vector<64x32xf32>
    %51 = tpu.matmul %49, %50, %cst_24 {dimension_numbers = #tpu.dot_dimension_numbers<[1], [0], [0], [1], [0, 0, 1, 1], [], []>} : vector<64x16xbf16>, vector<16x32xbf16>, vector<64x32xf32> -> vector<64x32xf32>
    %52 = arith.addf %48, %51 : vector<64x32xf32>
    %c0_25 = arith.constant 0 : index
    %c0_26 = arith.constant 0 : index
    %53 = vector.load %arg12[%c0_25, %c0_26] : memref<64x32xf32, #tpu.memory_space<vmem>>, vector<64x32xf32>
    tpu.vector_store %arg12[%c0_25, %c0_26], %52 {strides = array<i32>} : memref<64x32xf32, #tpu.memory_space<vmem>>, vector<64x32xf32>,
    %c0_i32_27 = arith.constant 0 : i32
    %54 = arith.cmpi eq, %arg1, %c0_i32_27 : i32
    %55 = arith.extui %54 : i1 to i32
    %c0_i32_28 = arith.constant 0 : i32
    %56 = arith.cmpi ne, %55, %c0_i32_28 : i32
    scf.if %56 {
      %c0_29 = arith.constant 0 : index
      %c0_30 = arith.constant 0 : index
      %57 = vector.load %arg12[%c0_29, %c0_30] : memref<64x32xf32, #tpu.memory_space<vmem>>, vector<64x32xf32>
      %c0_31 = arith.constant 0 : index
      %c0_32 = arith.constant 0 : index
      %58 = vector.load %arg7[%c0_31, %c0_32] : memref<1x32xf32, #tpu.memory_space<vmem>>, vector<1x32xf32>
      %59 = vector.broadcast %58 : vector<1x32xf32> to vector<64x32xf32>
      %60 = arith.addf %57, %59 : vector<64x32xf32>
      %c0_33 = arith.constant 0 : index
      %c0_34 = arith.constant 0 : index
      %61 = vector.load %arg9[%c0_33, %c0_34] : memref<64x32xf32, #tpu.memory_space<vmem>>, vector<64x32xf32>
      tpu.vector_store %arg9[%c0_33, %c0_34], %60 {strides = array<i32>} : memref<64x32xf32, #tpu.memory_space<vmem>>, vector<64x32xf32>,
    } else {
    }
    return
  }
  func.func @transform_0(%arg0: i32, %arg1: i32) -> (i32, i32) {
    %c0_i32 = arith.constant 0 : i32
    %c0_i32_0 = arith.constant 0 : i32
    return %arg0, %c0_i32 : i32, i32
  }
  func.func @transform_1(%arg0: i32, %arg1: i32) -> (i32, i32) {
    %c0_i32 = arith.constant 0 : i32
    %c0_i32_0 = arith.constant 0 : i32
    %c0_i32_1 = arith.constant 0 : i32
    return %c0_i32, %c0_i32_0 : i32, i32
  }
  func.func @transform_2(%arg0: i32, %arg1: i32) -> (i32, i32) {
    %c0_i32 = arith.constant 0 : i32
    %c0_i32_0 = arith.constant 0 : i32
    return %c0_i32, %arg1 : i32, i32
  }
  func.func @transform_3(%arg0: i32, %arg1: i32) -> (i32, i32) {
    %c0_i32 = arith.constant 0 : i32
    %c0_i32_0 = arith.constant 0 : i32
    return %c0_i32, %arg1 : i32, i32
  }
  func.func @transform_4(%arg0: i32, %arg1: i32) -> (i32, i32) {
    %c0_i32 = arith.constant 0 : i32
    %c0_i32_0 = arith.constant 0 : i32
    return %arg1, %c0_i32 : i32, i32
  }
  func.func @transform_5(%arg0: i32, %arg1: i32) -> (i32, i32) {
    %c0_i32 = arith.constant 0 : i32
    %c0_i32_0 = arith.constant 0 : i32
    %c0_i32_1 = arith.constant 0 : i32
    return %c0_i32, %c0_i32_0 : i32, i32
  }
  func.func @transform_6(%arg0: i32, %arg1: i32) -> (i32, i32) {
    %c0_i32 = arith.constant 0 : i32
    %c0_i32_0 = arith.constant 0 : i32
    %c0_i32_1 = arith.constant 0 : i32
    return %c0_i32, %c0_i32_0 : i32, i32
  }
  func.func @transform_7(%arg0: i32, %arg1: i32) -> (i32, i32) {
    %c0_i32 = arith.constant 0 : i32
    %c0_i32_0 = arith.constant 0 : i32
    return %arg0, %c0_i32 : i32, i32
  }
  func.func @transform_8(%arg0: i32, %arg1: i32) -> (i32, i32) {
    %c0_i32 = arith.constant 0 : i32
    %c0_i32_0 = arith.constant 0 : i32
    return %arg0, %c0_i32 : i32, i32
  }
}

module attributes {stable_mosaic.version = 11 : i64} {
  func.func @_coor_descent_kernel(%arg0: i32, %arg1: memref<2x64xf32, #tpu.memory_space<vmem>>, %arg2: memref<2x64xf32, #tpu.memory_space<vmem>>) attributes {dimension_semantics = [#tpu.dimension_semantics<parallel>], iteration_bounds = array<i64: 1>, scalar_prefetch = 0 : i64, scratch_operands = 0 : i64, tpu.core_type = #tpu.core_type<tc>, window_params = [{transform_indices = @transform_0, window_bounds = array<i64: 2, 64>}, {transform_indices = @transform_1, window_bounds = array<i64: 2, 64>}]} {
    %c0 = arith.constant 0 : index
    %c0_0 = arith.constant 0 : index
    %0 = vector.load %arg1[%c0, %c0_0] : memref<2x64xf32, #tpu.memory_space<vmem>>, vector<2x64xf32>
    %cst = arith.constant 0.000000e+00 : f32
    %1 = vector.broadcast %cst : f32 to vector<2x1xf32>
    %cst_1 = arith.constant 0.000000e+00 : f32
    %2 = vector.broadcast %cst_1 : f32 to vector<2x64xf32>
    %3 = arith.subf %2, %0 : vector<2x64xf32>
    %c0_i32 = arith.constant 0 : i32
    %c25_i32 = arith.constant 25 : i32
    %4 = arith.addi %c0_i32, %c25_i32 : i32
    %c1_i32 = arith.constant 1 : i32
    %5:2 = scf.for %arg3 = %c0_i32 to %4 step %c1_i32 iter_args(%arg4 = %1, %arg5 = %3) -> (vector<2x1xf32>, vector<2x64xf32>)  : i32 {
      %13 = arith.addf %0, %arg5 : vector<2x64xf32>
      %cst_5 = arith.constant 1.000000e+00 : f32
      %14 = vector.broadcast %cst_5 : f32 to vector<2x64xf32>
      %15 = arith.mulf %13, %14 : vector<2x64xf32>
      %cst_6 = arith.constant dense<0xFF800000> : vector<2xf32>
      %16 = vector.multi_reduction <maximumf>, %15, %cst_6 [1] : vector<2x64xf32> to vector<2xf32>
      %17 = vector.shape_cast %16 : vector<2xf32> to vector<2x1xf32>
      %18 = vector.broadcast %17 : vector<2x1xf32> to vector<2x64xf32>
      %19 = arith.subf %15, %18 : vector<2x64xf32>
      %20 = math.exp %19 : vector<2x64xf32>
      %cst_7 = arith.constant dense<0.000000e+00> : vector<2xf32>
      %21 = vector.multi_reduction <add>, %20, %cst_7 [1] : vector<2x64xf32> to vector<2xf32>
      %22 = vector.shape_cast %21 : vector<2xf32> to vector<2x1xf32>
      %23 = math.log %22 : vector<2x1xf32>
      %24 = arith.addf %17, %23 : vector<2x1xf32>
      %cst_8 = arith.constant 2.19722462 : f32
      %25 = vector.broadcast %cst_8 : f32 to vector<2x1xf32>
      %26 = arith.subf %25, %24 : vector<2x1xf32>
      %cst_9 = arith.constant 1.000000e+00 : f32
      %27 = vector.broadcast %cst_9 : f32 to vector<2x1xf32>
      %28 = arith.mulf %27, %26 : vector<2x1xf32>
      %29 = vector.broadcast %28 : vector<2x1xf32> to vector<2x64xf32>
      %30 = arith.addf %0, %29 : vector<2x64xf32>
      %cst_10 = arith.constant 0.000000e+00 : f32
      %31 = vector.broadcast %cst_10 : f32 to vector<2x64xf32>
      %32 = arith.maximumf %30, %31 : vector<2x64xf32>
      %cst_11 = arith.constant 0.000000e+00 : f32
      %33 = vector.broadcast %cst_11 : f32 to vector<2x64xf32>
      %34 = arith.subf %33, %32 : vector<2x64xf32>
      %35 = arith.addf %0, %34 : vector<2x64xf32>
      %cst_12 = arith.constant 1.000000e+00 : f32
      %36 = vector.broadcast %cst_12 : f32 to vector<2x64xf32>
      %37 = arith.mulf %35, %36 : vector<2x64xf32>
      %cst_13 = arith.constant dense<0xFF800000> : vector<2xf32>
      %38 = vector.multi_reduction <maximumf>, %37, %cst_13 [1] : vector<2x64xf32> to vector<2xf32>
      %39 = vector.shape_cast %38 : vector<2xf32> to vector<2x1xf32>
      %40 = vector.broadcast %39 : vector<2x1xf32> to vector<2x64xf32>
      %41 = arith.subf %37, %40 : vector<2x64xf32>
      %42 = math.exp %41 : vector<2x64xf32>
      %cst_14 = arith.constant dense<0.000000e+00> : vector<2xf32>
      %43 = vector.multi_reduction <add>, %42, %cst_14 [1] : vector<2x64xf32> to vector<2xf32>
      %44 = vector.shape_cast %43 : vector<2xf32> to vector<2x1xf32>
      %45 = math.log %44 : vector<2x1xf32>
      %46 = arith.addf %39, %45 : vector<2x1xf32>
      %cst_15 = arith.constant 2.19722462 : f32
      %47 = vector.broadcast %cst_15 : f32 to vector<2x1xf32>
      %48 = arith.subf %47, %46 : vector<2x1xf32>
      %cst_16 = arith.constant 1.000000e+00 : f32
      %49 = vector.broadcast %cst_16 : f32 to vector<2x1xf32>
      %50 = arith.mulf %49, %48 : vector<2x1xf32>
      %51 = vector.broadcast %50 : vector<2x1xf32> to vector<2x64xf32>
      %52 = arith.addf %0, %51 : vector<2x64xf32>
      %cst_17 = arith.constant 0.000000e+00 : f32
      %53 = vector.broadcast %cst_17 : f32 to vector<2x64xf32>
      %54 = arith.maximumf %52, %53 : vector<2x64xf32>
      %cst_18 = arith.constant 0.000000e+00 : f32
      %55 = vector.broadcast %cst_18 : f32 to vector<2x64xf32>
      %56 = arith.subf %55, %54 : vector<2x64xf32>
      scf.yield %50, %56 : vector<2x1xf32>, vector<2x64xf32>
    }
    %6 = vector.broadcast %5#0 : vector<2x1xf32> to vector<2x64xf32>
    %7 = arith.addf %0, %6 : vector<2x64xf32>
    %8 = arith.addf %7, %5#1 : vector<2x64xf32>
    %cst_2 = arith.constant 1.000000e+00 : f32
    %9 = vector.broadcast %cst_2 : f32 to vector<2x64xf32>
    %10 = arith.mulf %8, %9 : vector<2x64xf32>
    %11 = math.exp %10 : vector<2x64xf32>
    %c0_3 = arith.constant 0 : index
    %c0_4 = arith.constant 0 : index
    %12 = vector.load %arg2[%c0_3, %c0_4] : memref<2x64xf32, #tpu.memory_space<vmem>>, vector<2x64xf32>
    tpu.vector_store %arg2[%c0_3, %c0_4], %11 {strides = array<i32>} : memref<2x64xf32, #tpu.memory_space<vmem>>, vector<2x64xf32>,
    return
  }
  func.func @transform_0(%arg0: i32) -> (i32, i32) {
    %c0_i32 = arith.constant 0 : i32
    %c0_i32_0 = arith.constant 0 : i32
    return %arg0, %c0_i32 : i32, i32
  }
  func.func @transform_1(%arg0: i32) -> (i32, i32) {
    %c0_i32 = arith.constant 0 : i32
    %c0_i32_0 = arith.constant 0 : i32
    return %arg0, %c0_i32 : i32, i32
  }
}

module attributes {stable_mosaic.version = 11 : i64} {
  func.func @_ff_kernel(%arg0: i32, %arg1: i32, %arg2: memref<8x32xf32, #tpu.memory_space<vmem>>, %arg3: memref<1x32xf32, #tpu.memory_space<vmem>>, %arg4: memref<32x128xbf16, #tpu.memory_space<vmem>>, %arg5: memref<1x128xf32, #tpu.memory_space<vmem>>, %arg6: memref<128x32xbf16, #tpu.memory_space<vmem>>, %arg7: memref<1x32xf32, #tpu.memory_space<vmem>>, %arg8: memref<8x32xf32, #tpu.memory_space<vmem>>, %arg9: memref<8x32xbf16, #tpu.memory_space<vmem>>, %arg10: memref<8x32xf32, #tpu.memory_space<vmem>>) attributes {dimension_semantics = [#tpu.dimension_semantics<parallel>, #tpu.dimension_semantics<arbitrary>], iteration_bounds = array<i64: 2, 1>, scalar_prefetch = 0 : i64, scratch_operands = 2 : i64, tpu.core_type = #tpu.core_type<tc>, window_params = [{transform_indices = @transform_0, window_bounds = array<i64: 8, 32>}, {pipeline_mode = #tpu.pipeline_mode<synchronous>, transform_indices = @transform_1, window_bounds = array<i64: 1, 32>}, {transform_indices = @transform_2, window_bounds = array<i64: 32, 128>}, {transform_indices = @transform_3, window_bounds = array<i64: 1, 128>}, {transform_indices = @transform_4, window_bounds = array<i64: 128, 32>}, {pipeline_mode = #tpu.pipeline_mode<synchronous>, transform_indices = @transform_5, window_bounds = array<i64: 1, 32>}, {transform_indices = @transform_6, window_bounds = array<i64: 8, 32>}]} {
    %c0_i32 = arith.constant 0 : i32
    %0 = arith.cmpi eq, %arg1, %c0_i32 : i32
    %1 = arith.extui %0 : i1 to i32
    %c0_i32_0 = arith.constant 0 : i32
    %2 = arith.cmpi ne, %1, %c0_i32_0 : i32
    scf.if %2 {
      %c0_29 = arith.constant 0 : index
      %c0_30 = arith.constant 0 : index
      %57 = vector.load %arg2[%c0_29, %c0_30] : memref<8x32xf32, #tpu.memory_space<vmem>>, vector<8x32xf32>
      %58 = arith.mulf %57, %57 : vector<8x32xf32>
      %cst_31 = arith.constant dense<0.000000e+00> : vector<8xf32>
      %59 = vector.multi_reduction <add>, %58, %cst_31 [1] : vector<8x32xf32> to vector<8xf32>
      %60 = vector.shape_cast %59 : vector<8xf32> to vector<8x1xf32>
      %cst_32 = arith.constant 1.000000e-24 : f32
      %61 = vector.broadcast %cst_32 : f32 to vector<8x1xf32>
      %62 = arith.maximumf %60, %61 : vector<8x1xf32>
      %63 = math.rsqrt %62 : vector<8x1xf32>
      %64 = vector.broadcast %63 : vector<8x1xf32> to vector<8x32xf32>
      %65 = arith.mulf %57, %64 : vector<8x32xf32>
      %c0_33 = arith.constant 0 : index
      %c0_34 = arith.constant 0 : index
      %66 = vector.load %arg3[%c0_33, %c0_34] : memref<1x32xf32, #tpu.memory_space<vmem>>, vector<1x32xf32>
      %67 = vector.broadcast %66 : vector<1x32xf32> to vector<8x32xf32>
      %68 = arith.mulf %65, %67 : vector<8x32xf32>
      %69 = arith.truncf %68 : vector<8x32xf32> to vector<8x32xbf16>
      %c0_35 = arith.constant 0 : index
      %c0_36 = arith.constant 0 : index
      %70 = vector.load %arg9[%c0_35, %c0_36] : memref<8x32xbf16, #tpu.memory_space<vmem>>, vector<8x32xbf16>
      tpu.vector_store %arg9[%c0_35, %c0_36], %69 {strides = array<i32>} : memref<8x32xbf16, #tpu.memory_space<vmem>>, vector<8x32xbf16>,
      %cst_37 = arith.constant 0.000000e+00 : f32
      %71 = vector.broadcast %cst_37 : f32 to vector<8x32xf32>
      %c0_38 = arith.constant 0 : index
      %c0_39 = arith.constant 0 : index
      %72 = vector.load %arg10[%c0_38, %c0_39] : memref<8x32xf32, #tpu.memory_space<vmem>>, vector<8x32xf32>
      tpu.vector_store %arg10[%c0_38, %c0_39], %71 {strides = array<i32>} : memref<8x32xf32, #tpu.memory_space<vmem>>, vector<8x32xf32>,
    } else {
    }
    %c0 = arith.constant 0 : index
    %c0_1 = arith.constant 0 : index
    %3 = vector.load %arg9[%c0, %c0_1] : memref<8x32xbf16, #tpu.memory_space<vmem>>, vector<8x32xbf16>
    %c0_2 = arith.constant 0 : index
    %c0_3 = arith.constant 0 : index
    %4 = vector.load %arg4[%c0_2, %c0_3] : memref<32x128xbf16, #tpu.memory_space<vmem>>, vector<32x128xbf16>
    %cst = arith.constant dense<0.000000e+00> : vector<8x128xf32>
    %5 = tpu.matmul %3, %4, %cst {dimension_numbers = #tpu.dot_dimension_numbers<[1], [0], [0], [1], [0, 0, 1, 1], [], []>} : vector<8x32xbf16>, vector<32x128xbf16>, vector<8x128xf32> -> vector<8x128xf32>
    %c0_4 = arith.constant 0 : index
    %c0_5 = arith.constant 0 : index
    %6 = vector.load %arg5[%c0_4, %c0_5] : memref<1x128xf32, #tpu.memory_space<vmem>>, vector<1x128xf32>
    %7 = vector.broadcast %6 : vector<1x128xf32> to vector<8x128xf32>
    %8 = arith.addf %5, %7 : vector<8x128xf32>
    %cst_6 = arith.constant 0.707106769 : f32
    %9 = vector.broadcast %cst_6 : f32 to vector<8x128xf32>
    %10 = arith.mulf %8, %9 : vector<8x128xf32>
    %11 = math.absf %10 : vector<8x128xf32>
    %cst_7 = arith.constant 0.327591091 : f32
    %12 = vector.broadcast %cst_7 : f32 to vector<8x128xf32>
    %13 = arith.mulf %12, %11 : vector<8x128xf32>
    %cst_8 = arith.constant 1.000000e+00 : f32
    %14 = vector.broadcast %cst_8 : f32 to vector<8x128xf32>
    %15 = arith.addf %14, %13 : vector<8x128xf32>
    %16 = tpu.reciprocal %15 {approx = true} : vector<8x128xf32> -> vector<8x128xf32>
    %cst_9 = arith.constant 1.06140542 : f32
    %17 = vector.broadcast %cst_9 : f32 to vector<8x128xf32>
    %18 = arith.mulf %16, %17 : vector<8x128xf32>
    %cst_10 = arith.constant -1.45315206 : f32
    %19 = vector.broadcast %cst_10 : f32 to vector<8x128xf32>
    %20 = arith.addf %19, %18 : vector<8x128xf32>
    %21 = arith.mulf %16, %20 : vector<8x128xf32>
    %cst_11 = arith.constant 1.42141378 : f32
    %22 = vector.broadcast %cst_11 : f32 to vector<8x128xf32>
    %23 = arith.addf %22, %21 : vector<8x128xf32>
    %24 = arith.mulf %16, %23 : vector<8x128xf32>
    %cst_12 = arith.constant -0.284496725 : f32
    %25 = vector.broadcast %cst_12 : f32 to vector<8x128xf32>
    %26 = arith.addf %25, %24 : vector<8x128xf32>
    %27 = arith.mulf %16, %26 : vector<8x128xf32>
    %cst_13 = arith.constant 0.254829586 : f32
    %28 = vector.broadcast %cst_13 : f32 to vector<8x128xf32>
    %29 = arith.addf %28, %27 : vector<8x128xf32>
    %30 = arith.mulf %16, %29 : vector<8x128xf32>
    %cst_14 = arith.constant 0.000000e+00 : f32
    %31 = vector.broadcast %cst_14 : f32 to vector<8x128xf32>
    %32 = arith.subf %31, %11 : vector<8x128xf32>
    %33 = arith.mulf %32, %11 : vector<8x128xf32>
    %34 = math.exp %33 : vector<8x128xf32>
    %35 = arith.mulf %30, %34 : vector<8x128xf32>
    %cst_15 = arith.constant 1.000000e+00 : f32
    %36 = vector.broadcast %cst_15 : f32 to vector<8x128xf32>
    %37 = arith.subf %36, %35 : vector<8x128xf32>
    %cst_16 = arith.constant 0.000000e+00 : f32
    %38 = vector.broadcast %cst_16 : f32 to vector<8x128xf32>
    %39 = arith.cmpf olt, %10, %38 : vector<8x128xf32>
    %cst_17 = arith.constant 0.000000e+00 : f32
    %40 = vector.broadcast %cst_17 : f32 to vector<8x128xf32>
    %41 = arith.subf %40, %37 : vector<8x128xf32>
    %42 = arith.select %39, %41, %37 : vector<8x128xi1>, vector<8x128xf32>
    %cst_18 = arith.constant 5.000000e-01 : f32
    %43 = vector.broadcast %cst_18 : f32 to vector<8x128xf32>
    %44 = arith.mulf %43, %8 : vector<8x128xf32>
    %cst_19 = arith.constant 1.000000e+00 : f32
    %45 = vector.broadcast %cst_19 : f32 to vector<8x128xf32>
    %46 = arith.addf %45, %42 : vector<8x128xf32>
    %47 = arith.mulf %44, %46 : vector<8x128xf32>
    %c0_20 = arith.constant 0 : index
    %c0_21 = arith.constant 0 : index
    %48 = vector.load %arg10[%c0_20, %c0_21] : memref<8x32xf32, #tpu.memory_space<vmem>>, vector<8x32xf32>
    %49 = arith.truncf %47 : vector<8x128xf32> to vector<8x128xbf16>
    %c0_22 = arith.constant 0 : index
    %c0_23 = arith.constant 0 : index
    %50 = vector.load %arg6[%c0_22, %c0_23] : memref<128x32xbf16, #tpu.memory_space<vmem>>, vector<128x32xbf16>
    %cst_24 = arith.constant dense<0.000000e+00> : vector<8x32xf32>
    %51 = tpu.matmul %49, %50, %cst_24 {dimension_numbers = #tpu.dot_dimension_numbers<[1], [0], [0], [1], [0, 0, 1, 1], [], []>} : vector<8x128xbf16>, vector<128x32xbf16>, vector<8x32xf32> -> vector<8x32xf32>
    %52 = arith.addf %48, %51 : vector<8x32xf32>
    %c0_25 = arith.constant 0 : index
    %c0_26 = arith.constant 0 : index
    %53 = vector.load %arg10[%c0_25, %c0_26] : memref<8x32xf32, #tpu.memory_space<vmem>>, vector<8x32xf32>
    tpu.vector_store %arg10[%c0_25, %c0_26], %52 {strides = array<i32>} : memref<8x32xf32, #tpu.memory_space<vmem>>, vector<8x32xf32>,
    %c0_i32_27 = arith.constant 0 : i32
    %54 = arith.cmpi eq, %arg1, %c0_i32_27 : i32
    %55 = arith.extui %54 : i1 to i32
    %c0_i32_28 = arith.constant 0 : i32
    %56 = arith.cmpi ne, %55, %c0_i32_28 : i32
    scf.if %56 {
      %c0_29 = arith.constant 0 : index
      %c0_30 = arith.constant 0 : index
      %57 = vector.load %arg10[%c0_29, %c0_30] : memref<8x32xf32, #tpu.memory_space<vmem>>, vector<8x32xf32>
      %c0_31 = arith.constant 0 : index
      %c0_32 = arith.constant 0 : index
      %58 = vector.load %arg7[%c0_31, %c0_32] : memref<1x32xf32, #tpu.memory_space<vmem>>, vector<1x32xf32>
      %59 = vector.broadcast %58 : vector<1x32xf32> to vector<8x32xf32>
      %60 = arith.addf %57, %59 : vector<8x32xf32>
      %c0_33 = arith.constant 0 : index
      %c0_34 = arith.constant 0 : index
      %61 = vector.load %arg8[%c0_33, %c0_34] : memref<8x32xf32, #tpu.memory_space<vmem>>, vector<8x32xf32>
      tpu.vector_store %arg8[%c0_33, %c0_34], %60 {strides = array<i32>} : memref<8x32xf32, #tpu.memory_space<vmem>>, vector<8x32xf32>,
    } else {
    }
    return
  }
  func.func @transform_0(%arg0: i32, %arg1: i32) -> (i32, i32) {
    %c0_i32 = arith.constant 0 : i32
    %c0_i32_0 = arith.constant 0 : i32
    return %arg0, %c0_i32 : i32, i32
  }
  func.func @transform_1(%arg0: i32, %arg1: i32) -> (i32, i32) {
    %c0_i32 = arith.constant 0 : i32
    %c0_i32_0 = arith.constant 0 : i32
    %c0_i32_1 = arith.constant 0 : i32
    return %c0_i32, %c0_i32_0 : i32, i32
  }
  func.func @transform_2(%arg0: i32, %arg1: i32) -> (i32, i32) {
    %c0_i32 = arith.constant 0 : i32
    %c0_i32_0 = arith.constant 0 : i32
    return %c0_i32, %arg1 : i32, i32
  }
  func.func @transform_3(%arg0: i32, %arg1: i32) -> (i32, i32) {
    %c0_i32 = arith.constant 0 : i32
    %c0_i32_0 = arith.constant 0 : i32
    return %c0_i32, %arg1 : i32, i32
  }
  func.func @transform_4(%arg0: i32, %arg1: i32) -> (i32, i32) {
    %c0_i32 = arith.constant 0 : i32
    %c0_i32_0 = arith.constant 0 : i32
    return %arg1, %c0_i32 : i32, i32
  }
  func.func @transform_5(%arg0: i32, %arg1: i32) -> (i32, i32) {
    %c0_i32 = arith.constant 0 : i32
    %c0_i32_0 = arith.constant 0 : i32
    %c0_i32_1 = arith.constant 0 : i32
    return %c0_i32, %c0_i32_0 : i32, i32
  }
  func.func @transform_6(%arg0: i32, %arg1: i32) -> (i32, i32) {
    %c0_i32 = arith.constant 0 : i32
    %c0_i32_0 = arith.constant 0 : i32
    return %arg0, %c0_i32 : i32, i32
  }
}

</mosaic_0001>

<llo_original>
// kernel: conditional_routed_feedforward.4
$region0: #{conditional_routed_feedforward.4}
  #allocation0 [shape = 'u32[]', space=smem, size = 0x4, offset = 0x4, fixed_abs, tag = 'smem constant byte address 0x4 - core index']
  #allocation1 [shape = 'u32[144,128]{1,0:T(1,128)}', space=vmem, size = 0x12000, scoped, tag = 'internal scratch']
  %s0 = inlined_call_operand.vmem [shape: f32[2,64], index: 0, kind: input, shape index: {}]
  %s1 = inlined_call_operand.vmem [shape: f32[2,64], index: 1, kind: output, shape index: {}]
  %s2 = sld [smem:[#allocation0]]
  $region21: #{conditional_routed_feedforward.4} parent=0
    _
  %s4 = ssub.s32 1, %s2
  %s5 = scalar_select 0, %s4, %s2
  // Predicated region
  $region2: #{conditional_routed_feedforward.4} parent=0 // pred_check
    _
  $region3: #{conditional_routed_feedforward.4} parent=0 // pred_check_branch
    %7 = sbr.rel (0) target = $region5
  $region4: #{conditional_routed_feedforward.4} parent=0 // pred_region
    _
  $region5: #{conditional_routed_feedforward.4} parent=0 // pred_fallthru
    _
  %v8 = vld [vmem:[%s0] sm:$0x3]
  %v9 = vsub.f32 0.0, %v8
  loop: start=0, step=1, limit=25
  $region6: #{conditional_routed_feedforward.4} parent=0 // loop_pre_header
    _
  $region7: #{conditional_routed_feedforward.4} parent=0 // loop_header
    %s11 = sphi 0, %s15
    %p12 = scmp.ge.s32.totalorder %s11, 25
    %v16 = vphi 0.0, %v49
    %v17 = vphi %v9, %v52
  $region8: #{conditional_routed_feedforward.4} parent=0 // loop_header_branch
    %14 = sbr.rel (%p12) target = $region12
  $region9: #{conditional_routed_feedforward.4} parent=0 // loop_body
    %v18 = vadd.f32 %v8, %v17
    %vm19 = vcmask 517120
    %v20 = vsel %vm19, %v18, -inf
    %21 = vmax.xlane.f32.xlu0 %v20
    %v22 = vpop.xlane.xlu0 %21
    %v23 = vsub.f32 %v18, %v22
    %v24 = vmul.f32 %v23, 1.442695
    %v25 = vpow.pop %v24
    %v26 = vsel %vm19, %v25, 0.0
    %27 = vadd.xlane.f32.xlu0 %v26
    %v28 = vpop.xlane.xlu0 %27
    %v29 = vlog2.pop %v28
    %v30 = vmul.f32 %v29, 0.6931472
    %v31 = vadd.f32 %v22, %v30
    %v32 = vsub.f32 2.1972246, %v31
    %v33 = vadd.f32 %v8, %v32
    %v34 = vmax.f32 %v33, 0.0
    %v35 = vsub.f32 0.0, %v34
    %v36 = vadd.f32 %v8, %v35
    %v37 = vsel %vm19, %v36, -inf
    %38 = vmax.xlane.f32.xlu0 %v37
    %v39 = vpop.xlane.xlu0 %38
    %v40 = vsub.f32 %v36, %v39
    %v41 = vmul.f32 %v40, 1.442695
    %v42 = vpow.pop %v41
    %v43 = vsel %vm19, %v42, 0.0
    %44 = vadd.xlane.f32.xlu0 %v43
    %v45 = vpop.xlane.xlu0 %44
    %v46 = vlog2.pop %v45
    %v47 = vmul.f32 %v46, 0.6931472
    %v48 = vadd.f32 %v39, %v47
    %v49 = vsub.f32 2.1972246, %v48
    %v50 = vadd.f32 %v8, %v49
    %v51 = vmax.f32 %v50, 0.0
    %v52 = vsub.f32 0.0, %v51
  $region10: #{conditional_routed_feedforward.4} parent=0 // loop_footer
    %s15 = sadd.s32 1, %s11
  $region11: #{conditional_routed_feedforward.4} parent=0 // loop_footer_branch
    %10 = sbr.rel target = $region7
  $region12: #{conditional_routed_feedforward.4} parent=0 // loop_exit
    _
  %v53 = vadd.f32 %v8, %v16
  %v54 = vadd.f32 %v53, %v17
  %v55 = vmul.f32 %v54, 1.442695
  %v56 = vpow.pop %v55
  %vm57 = vcmask 517120
  %58 = vst.msk [vmem:[%s1] sm:$0x3] %vm57, %v56
  // Predicated region
  $region13: #{conditional_routed_feedforward.4} parent=0 // pred_check
    _
  $region14: #{conditional_routed_feedforward.4} parent=0 // pred_check_branch
    %60 = sbr.rel (0) target = $region16
  $region15: #{conditional_routed_feedforward.4} parent=0 // pred_region
    _
  $region16: #{conditional_routed_feedforward.4} parent=0 // pred_fallthru
    _
  // Predicated region
  $region17: #{conditional_routed_feedforward.4} parent=0 // pred_check
    _
  $region18: #{conditional_routed_feedforward.4} parent=0 // pred_check_branch
    %62 = sbr.rel (0) target = $region20
  $region19: #{conditional_routed_feedforward.4} parent=0 // pred_region
    _
  $region20: #{conditional_routed_feedforward.4} parent=0 // pred_fallthru
    _

// kernel: conditional_routed_feedforward.3
$region0: #{conditional_routed_feedforward.3}
  #allocation0 [shape = 'u32[]', space=smem, size = 0x4, offset = 0x4, fixed_abs, tag = 'smem constant byte address 0x4 - core index']
  #allocation1 [shape = 'u32[144,128]{1,0:T(1,128)}', space=vmem, size = 0x12000, scoped, tag = 'internal scratch']
  #allocation2 [shape = 'bf16[64,32]{1,0:T(8,128)(2,1)}', space=vmem, size = 0x4000, scoped, tag = 'scratch operand']
  #allocation3 [shape = 'f32[64,32]{1,0:T(8,128)}', space=vmem, size = 0x8000, scoped, tag = 'scratch operand']
  %s0 = inlined_call_operand.vmem [shape: f32[128,32], index: 0, kind: input, shape index: {}]
  %s1 = inlined_call_operand.vmem [shape: f32[1,32], index: 1, kind: input, shape index: {}]
  %s2 = inlined_call_operand.vmem [shape: bf16[32,16], index: 2, kind: input, shape index: {}]
  %s3 = inlined_call_operand.vmem [shape: f32[1,16], index: 3, kind: input, shape index: {}]
  %s4 = inlined_call_operand.vmem [shape: bf16[16,32], index: 4, kind: input, shape index: {}]
  %s5 = inlined_call_operand.vmem [shape: f32[1,32], index: 5, kind: input, shape index: {}]
  %s6 = inlined_call_operand.vmem [shape: f32[1,32], index: 6, kind: input, shape index: {}]
  %s7 = inlined_call_operand.vmem [shape: f32[128,32], index: 7, kind: output, shape index: {0}]
  %s8 = inlined_call_operand.vmem [shape: f32[128,1], index: 8, kind: output, shape index: {1}]
  %9 = xla_tuple %s7, %s8
  %s10 = sld [smem:[#allocation0]]
  $region77: #{conditional_routed_feedforward.3} parent=0
    _
  %s12 = ssub.s32 1, %s10
  %s13 = scalar_select 0, %s12, %s10
  loop: start=0, step=1, limit=4
  $region2: #{conditional_routed_feedforward.3} parent=0 // loop_pre_header
    _
  $region3: #{conditional_routed_feedforward.3} parent=0 // loop_header
    %s15 = sphi 0, %s19
    %p16 = scmp.ge.s32.totalorder %s15, 4
    %s22 = sphi 0, %s34
    %s23 = sphi 0, %s30
    %s24 = sphi 0, %s22
    %s25 = sphi 0, %s23
    %s26 = sphi 0, %s24
    %s27 = sphi 0, %s25
    %s37 = sphi 0, %s39
    %s40 = sphi 0, %s37
    %s41 = sphi 0, %s40
    %s57 = sphi 0, %s41
    %s61 = sphi 0, %s61
    %s63 = sphi 0, %s61
    %s64 = sphi 0, %s63
    %s78 = sphi 0, %s64
    %s84 = sphi 0, %s86
    %s87 = sphi 0, %s84
    %s88 = sphi 0, %s87
    %s104 = sphi 0, %s88
    %s110 = sphi 0, %s112
    %s113 = sphi 0, %s110
    %s114 = sphi 0, %s113
    %s130 = sphi 0, %s114
    %s136 = sphi 0, %s138
    %s139 = sphi 0, %s136
    %s140 = sphi 0, %s139
    %s156 = sphi 0, %s140
    %s160 = sphi 0, %s160
    %s162 = sphi 0, %s160
    %s163 = sphi 0, %s162
    %s177 = sphi 0, %s163
    %s181 = sphi 0, %s181
    %s183 = sphi 0, %s181
    %s184 = sphi 0, %s183
    %s198 = sphi 0, %s184
    %s204 = sphi 0, %s206
    %s207 = sphi 0, %s204
    %s208 = sphi 0, %s207
    %s224 = sphi 0, %s208
    %s230 = sphi 0, %s232
    %s233 = sphi 0, %s230
    %s234 = sphi 0, %s233
    %s250 = sphi 0, %s234
  $region4: #{conditional_routed_feedforward.3} parent=0 // loop_header_branch
    %18 = sbr.rel (%p16) target = $region8
  $region5: #{conditional_routed_feedforward.3} parent=0 // loop_body
    %s20 = ssub.s32 %s15, 1
    %s21 = ssub.s32 %s15, 2
    %s28 = sadd.s32 1, %s23
    %p29 = scmp.ge.s32.totalorder %s28, 1
    %s30 = scalar_select %p29, 0, %s28
    %s31 = sadd.s32 1, %s22
    %s32 = scalar_select %p29, %s31, %s22
    %p33 = scmp.ge.s32.totalorder %s32, 2
    %s34 = scalar_select %p33, 0, %s32
    %s35 = ssub.s32 %s22, %s34
    %p36 = scmp.eq.s32.totalorder %s35, 0
    %s38 = sadd.s32 %s37, 1
    %s39 = scalar_select %p36, %s37, %s38
    %p42 = pneg %p36
    %p43 = scmp.eq.s32.totalorder %s15, 1
    %p44 = por %p42, %p43
    %p45 = scmp.ne.s32.totalorder %s37, %s40
    %p46 = scmp.eq.s32.totalorder %s15, 0
    %p47 = por %p45, %p46
    %p48 = scmp.ne.s32.totalorder %s37, %s40
    %p49 = scmp.eq.s32.totalorder %s20, 1
    %p50 = por %p48, %p49
    %p51 = scmp.ne.s32.totalorder %s40, %s41
    %p52 = scmp.eq.s32.totalorder %s20, 0
    %p53 = por %p51, %p52
    %p54 = scmp.ne.s32.totalorder %s40, %s41
    %p55 = scmp.eq.s32.totalorder %s21, 1
    %p56 = por %p54, %p55
    %p58 = scmp.ne.s32.totalorder %s41, %s57
    %p59 = scmp.eq.s32.totalorder %s21, 0
    %p60 = por %p58, %p59
    %s62 = sadd.s32 %s61, 1
    %p65 = scmp.eq.s32.totalorder %s15, 1
    %p66 = scmp.ne.s32.totalorder %s61, %s63
    %p67 = scmp.eq.s32.totalorder %s15, 0
    %p68 = por %p66, %p67
    %p69 = scmp.ne.s32.totalorder %s61, %s63
    %p70 = scmp.eq.s32.totalorder %s20, 1
    %p71 = por %p69, %p70
    %p72 = scmp.ne.s32.totalorder %s63, %s64
    %p73 = scmp.eq.s32.totalorder %s20, 0
    %p74 = por %p72, %p73
    %p75 = scmp.ne.s32.totalorder %s63, %s64
    %p76 = scmp.eq.s32.totalorder %s21, 1
    %p77 = por %p75, %p76
    %p79 = scmp.ne.s32.totalorder %s64, %s78
    %p80 = scmp.eq.s32.totalorder %s21, 0
    %p81 = por %p79, %p80
    %s82 = ssub.s32 %s23, %s30
    %p83 = scmp.eq.s32.totalorder %s82, 0
    %s85 = sadd.s32 %s84, 1
    %s86 = scalar_select %p83, %s84, %s85
    %p89 = pneg %p83
    %p90 = scmp.eq.s32.totalorder %s15, 1
    %p91 = por %p89, %p90
    %p92 = scmp.ne.s32.totalorder %s84, %s87
    %p93 = scmp.eq.s32.totalorder %s15, 0
    %p94 = por %p92, %p93
    %p95 = scmp.ne.s32.totalorder %s84, %s87
    %p96 = scmp.eq.s32.totalorder %s20, 1
    %p97 = por %p95, %p96
    %p98 = scmp.ne.s32.totalorder %s87, %s88
    %p99 = scmp.eq.s32.totalorder %s20, 0
    %p100 = por %p98, %p99
    %p101 = scmp.ne.s32.totalorder %s87, %s88
    %p102 = scmp.eq.s32.totalorder %s21, 1
    %p103 = por %p101, %p102
    %p105 = scmp.ne.s32.totalorder %s88, %s104
    %p106 = scmp.eq.s32.totalorder %s21, 0
    %p107 = por %p105, %p106
    %s108 = ssub.s32 %s23, %s30
    %p109 = scmp.eq.s32.totalorder %s108, 0
    %s111 = sadd.s32 %s110, 1
    %s112 = scalar_select %p109, %s110, %s111
    %p115 = pneg %p109
    %p116 = scmp.eq.s32.totalorder %s15, 1
    %p117 = por %p115, %p116
    %p118 = scmp.ne.s32.totalorder %s110, %s113
    %p119 = scmp.eq.s32.totalorder %s15, 0
    %p120 = por %p118, %p119
    %p121 = scmp.ne.s32.totalorder %s110, %s113
    %p122 = scmp.eq.s32.totalorder %s20, 1
    %p123 = por %p121, %p122
    %p124 = scmp.ne.s32.totalorder %s113, %s114
    %p125 = scmp.eq.s32.totalorder %s20, 0
    %p126 = por %p124, %p125
    %p127 = scmp.ne.s32.totalorder %s113, %s114
    %p128 = scmp.eq.s32.totalorder %s21, 1
    %p129 = por %p127, %p128
    %p131 = scmp.ne.s32.totalorder %s114, %s130
    %p132 = scmp.eq.s32.totalorder %s21, 0
    %p133 = por %p131, %p132
    %s134 = ssub.s32 %s23, %s30
    %p135 = scmp.eq.s32.totalorder %s134, 0
    %s137 = sadd.s32 %s136, 1
    %s138 = scalar_select %p135, %s136, %s137
    %p141 = pneg %p135
    %p142 = scmp.eq.s32.totalorder %s15, 1
    %p143 = por %p141, %p142
    %p144 = scmp.ne.s32.totalorder %s136, %s139
    %p145 = scmp.eq.s32.totalorder %s15, 0
    %p146 = por %p144, %p145
    %p147 = scmp.ne.s32.totalorder %s136, %s139
    %p148 = scmp.eq.s32.totalorder %s20, 1
    %p149 = por %p147, %p148
    %p150 = scmp.ne.s32.totalorder %s139, %s140
    %p151 = scmp.eq.s32.totalorder %s20, 0
    %p152 = por %p150, %p151
    %p153 = scmp.ne.s32.totalorder %s139, %s140
    %p154 = scmp.eq.s32.totalorder %s21, 1
    %p155 = por %p153, %p154
    %p157 = scmp.ne.s32.totalorder %s140, %s156
    %p158 = scmp.eq.s32.totalorder %s21, 0
    %p159 = por %p157, %p158
    %s161 = sadd.s32 %s160, 1
    %p164 = scmp.eq.s32.totalorder %s15, 1
    %p165 = scmp.ne.s32.totalorder %s160, %s162
    %p166 = scmp.eq.s32.totalorder %s15, 0
    %p167 = por %p165, %p166
    %p168 = scmp.ne.s32.totalorder %s160, %s162
    %p169 = scmp.eq.s32.totalorder %s20, 1
    %p170 = por %p168, %p169
    %p171 = scmp.ne.s32.totalorder %s162, %s163
    %p172 = scmp.eq.s32.totalorder %s20, 0
    %p173 = por %p171, %p172
    %p174 = scmp.ne.s32.totalorder %s162, %s163
    %p175 = scmp.eq.s32.totalorder %s21, 1
    %p176 = por %p174, %p175
    %p178 = scmp.ne.s32.totalorder %s163, %s177
    %p179 = scmp.eq.s32.totalorder %s21, 0
    %p180 = por %p178, %p179
    %s182 = sadd.s32 %s181, 1
    %p185 = scmp.eq.s32.totalorder %s15, 1
    %p186 = scmp.ne.s32.totalorder %s181, %s183
    %p187 = scmp.eq.s32.totalorder %s15, 0
    %p188 = por %p186, %p187
    %p189 = scmp.ne.s32.totalorder %s181, %s183
    %p190 = scmp.eq.s32.totalorder %s20, 1
    %p191 = por %p189, %p190
    %p192 = scmp.ne.s32.totalorder %s183, %s184
    %p193 = scmp.eq.s32.totalorder %s20, 0
    %p194 = por %p192, %p193
    %p195 = scmp.ne.s32.totalorder %s183, %s184
    %p196 = scmp.eq.s32.totalorder %s21, 1
    %p197 = por %p195, %p196
    %p199 = scmp.ne.s32.totalorder %s184, %s198
    %p200 = scmp.eq.s32.totalorder %s21, 0
    %p201 = por %p199, %p200
    %s202 = ssub.s32 %s22, %s34
    %p203 = scmp.eq.s32.totalorder %s202, 0
    %s205 = sadd.s32 %s204, 1
    %s206 = scalar_select %p203, %s204, %s205
    %p209 = pneg %p203
    %p210 = scmp.eq.s32.totalorder %s15, 1
    %p211 = por %p209, %p210
    %p212 = scmp.ne.s32.totalorder %s204, %s207
    %p213 = scmp.eq.s32.totalorder %s15, 0
    %p214 = por %p212, %p213
    %p215 = scmp.ne.s32.totalorder %s204, %s207
    %p216 = scmp.eq.s32.totalorder %s20, 1
    %p217 = por %p215, %p216
    %p218 = scmp.ne.s32.totalorder %s207, %s208
    %p219 = scmp.eq.s32.totalorder %s20, 0
    %p220 = por %p218, %p219
    %p221 = scmp.ne.s32.totalorder %s207, %s208
    %p222 = scmp.eq.s32.totalorder %s21, 1
    %p223 = por %p221, %p222
    %p225 = scmp.ne.s32.totalorder %s208, %s224
    %p226 = scmp.eq.s32.totalorder %s21, 0
    %p227 = por %p225, %p226
    %s228 = ssub.s32 %s22, %s34
    %p229 = scmp.eq.s32.totalorder %s228, 0
    %s231 = sadd.s32 %s230, 1
    %s232 = scalar_select %p229, %s230, %s231
    %p235 = pneg %p229
    %p236 = scmp.eq.s32.totalorder %s15, 1
    %p237 = por %p235, %p236
    %p238 = scmp.ne.s32.totalorder %s230, %s233
    %p239 = scmp.eq.s32.totalorder %s15, 0
    %p240 = por %p238, %p239
    %p241 = scmp.ne.s32.totalorder %s230, %s233
    %p242 = scmp.eq.s32.totalorder %s20, 1
    %p243 = por %p241, %p242
    %p244 = scmp.ne.s32.totalorder %s233, %s234
    %p245 = scmp.eq.s32.totalorder %s20, 0
    %p246 = por %p244, %p245
    %p247 = scmp.ne.s32.totalorder %s233, %s234
    %p248 = scmp.eq.s32.totalorder %s21, 1
    %p249 = por %p247, %p248
    %p251 = scmp.ne.s32.totalorder %s234, %s250
    %p252 = scmp.eq.s32.totalorder %s21, 0
    %p253 = por %p251, %p252
    %p254 = scmp.le.s32.totalorder 1, %s15
    %p255 = scmp.lt.s32.totalorder %s15, 3
    %p256 = pnand %p254, %p255
    %p257 = pneg %p256
    // Predicated region
    $region9: #{conditional_routed_feedforward.3} parent=5 // pred_check
      _
    $region10: #{conditional_routed_feedforward.3} parent=5 // pred_check_branch
      %259 = sbr.rel (%p256) target = $region12
    $region11: #{conditional_routed_feedforward.3} parent=5 // pred_region
      %s260 = ssub.s32 %s15, 1
      // Predicated region
      $region13: #{conditional_routed_feedforward.3} parent=11 // pred_check
        %p261 = pneg %p74
      $region14: #{conditional_routed_feedforward.3} parent=11 // pred_check_branch
        %263 = sbr.rel (%p261) target = $region16
      $region15: #{conditional_routed_feedforward.3} parent=11 // pred_region
        _
      $region16: #{conditional_routed_feedforward.3} parent=11 // pred_fallthru
        _
      // Predicated region
      $region17: #{conditional_routed_feedforward.3} parent=11 // pred_check
        %p264 = pneg %p100
      $region18: #{conditional_routed_feedforward.3} parent=11 // pred_check_branch
        %266 = sbr.rel (%p264) target = $region20
      $region19: #{conditional_routed_feedforward.3} parent=11 // pred_region
        %p267 = scmp.lt.s32.totalorder %s25, 0
        %s268 = scalar_select %p267, %s25, 0
        %s269 = smul.addr %s268, 4
        %s270 = scalar_lea.vmem %s2, %s269
      $region20: #{conditional_routed_feedforward.3} parent=11 // pred_fallthru
        _
      // Predicated region
      $region21: #{conditional_routed_feedforward.3} parent=11 // pred_check
        %p271 = pneg %p126
      $region22: #{conditional_routed_feedforward.3} parent=11 // pred_check_branch
        %273 = sbr.rel (%p271) target = $region24
      $region23: #{conditional_routed_feedforward.3} parent=11 // pred_region
        %p274 = scmp.lt.s32.totalorder %s25, 0
        %s275 = scalar_select %p274, %s25, 0
        %s276 = scalar_lea.vmem %s3, %s275
      $region24: #{conditional_routed_feedforward.3} parent=11 // pred_fallthru
        _
      // Predicated region
      $region25: #{conditional_routed_feedforward.3} parent=11 // pred_check
        %p277 = pneg %p152
      $region26: #{conditional_routed_feedforward.3} parent=11 // pred_check_branch
        %279 = sbr.rel (%p277) target = $region28
      $region27: #{conditional_routed_feedforward.3} parent=11 // pred_region
        %s280 = smul.u32 2, %s25
        %p281 = scmp.lt.s32.totalorder %s280, 1
        %s282 = scalar_select %p281, %s280, 1
        %s283 = smul.addr %s282, 4
        %s284 = scalar_lea.vmem %s4, %s283
        %s285 = smul.u32 2, %s25
      $region28: #{conditional_routed_feedforward.3} parent=11 // pred_fallthru
        _
      // Predicated region
      $region29: #{conditional_routed_feedforward.3} parent=11 // pred_check
        %p286 = pneg %p173
      $region30: #{conditional_routed_feedforward.3} parent=11 // pred_check_branch
        %288 = sbr.rel (%p286) target = $region32
      $region31: #{conditional_routed_feedforward.3} parent=11 // pred_region
        _
      $region32: #{conditional_routed_feedforward.3} parent=11 // pred_fallthru
        _
      // Predicated region
      $region33: #{conditional_routed_feedforward.3} parent=11 // pred_check
        %p289 = pneg %p194
      $region34: #{conditional_routed_feedforward.3} parent=11 // pred_check_branch
        %291 = sbr.rel (%p289) target = $region36
      $region35: #{conditional_routed_feedforward.3} parent=11 // pred_region
        _
      $region36: #{conditional_routed_feedforward.3} parent=11 // pred_fallthru
        _
    $region12: #{conditional_routed_feedforward.3} parent=5 // pred_fallthru
      _
    %p292 = scmp.lt.s32.totalorder %s15, 2
    // Predicated region
    $region37: #{conditional_routed_feedforward.3} parent=5 // pred_check
      %p293 = pneg %p292
    $region38: #{conditional_routed_feedforward.3} parent=5 // pred_check_branch
      %295 = sbr.rel (%p293) target = $region40
    $region39: #{conditional_routed_feedforward.3} parent=5 // pred_region
      // Predicated region
      $region41: #{conditional_routed_feedforward.3} parent=39 // pred_check
        %p296 = pneg %p47
      $region42: #{conditional_routed_feedforward.3} parent=39 // pred_check_branch
        %298 = sbr.rel (%p296) target = $region44
      $region43: #{conditional_routed_feedforward.3} parent=39 // pred_region
        %s299 = smul.u32 8, %s22
        %p300 = scmp.lt.s32.totalorder %s299, 15
        %s301 = scalar_select %p300, %s299, 15
        %s302 = smul.addr %s301, 8
        %s303 = scalar_lea.vmem %s0, %s302
        %s304 = smul.u32 8, %s22
      $region44: #{conditional_routed_feedforward.3} parent=39 // pred_fallthru
        _
    $region40: #{conditional_routed_feedforward.3} parent=5 // pred_fallthru
      _
    %p305 = scmp.le.s32.totalorder 1, %s15
    %p306 = scmp.lt.s32.totalorder %s15, 3
    %p307 = pnand %p305, %p306
    %p308 = pneg %p307
    // Predicated region
    $region45: #{conditional_routed_feedforward.3} parent=5 // pred_check
      _
    $region46: #{conditional_routed_feedforward.3} parent=5 // pred_check_branch
      %310 = sbr.rel (%p307) target = $region48
    $region47: #{conditional_routed_feedforward.3} parent=5 // pred_region
      %s311 = ssub.s32 %s15, 1
      %s312 = smul.u32 8, %s24
      %p313 = scmp.lt.s32.totalorder %s312, 15
      %s314 = scalar_select %p313, %s312, 15
      %s315 = smul.addr %s314, 8
      %s316 = scalar_lea.vmem %s0, %s315
      %p317 = pneg %p53
      %p318 = pneg %p50
      %p319 = pneg %p74
      %p320 = pneg %p71
      %p321 = scmp.lt.s32.totalorder %s25, 0
      %s322 = scalar_select %p321, %s25, 0
      %s323 = smul.addr %s322, 4
      %s324 = scalar_lea.vmem %s2, %s323
      %p325 = pneg %p100
      %p326 = pneg %p97
      %p327 = scmp.lt.s32.totalorder %s25, 0
      %s328 = scalar_select %p327, %s25, 0
      %s329 = scalar_lea.vmem %s3, %s328
      %p330 = pneg %p126
      %p331 = pneg %p123
      %s332 = smul.u32 2, %s25
      %p333 = scmp.lt.s32.totalorder %s332, 1
      %s334 = scalar_select %p333, %s332, 1
      %s335 = smul.addr %s334, 4
      %s336 = scalar_lea.vmem %s4, %s335
      %p337 = pneg %p152
      %p338 = pneg %p149
      %p339 = pneg %p173
      %p340 = pneg %p170
      %p341 = pneg %p194
      %p342 = pneg %p191
      %p343 = pneg %p220
      %p344 = pneg %p217
      %s345 = smul.u32 8, %s24
      %p346 = scmp.lt.s32.totalorder %s345, 15
      %s347 = scalar_select %p346, %s345, 15
      %s348 = smul.addr %s347, 8
      %s349 = scalar_lea.vmem %s7, %s348
      %p350 = pneg %p246
      %p351 = pneg %p243
      %s352 = smul.u32 8, %s24
      %p353 = scmp.lt.s32.totalorder %s352, 15
      %s354 = scalar_select %p353, %s352, 15
      %s355 = smul.addr %s354, 8
      %s356 = scalar_lea.vmem %s8, %s355
      %s357 = smul.u32 8, %s24
      %p358 = scmp.lt.s32.totalorder %s357, 15
      %s359 = scalar_select %p358, %s357, 15
      %s360 = smul.addr %s359, 8
      %s361 = scalar_lea.vmem %s0, %s360
      %s362 = smul.u32 8, %s24
      %p363 = scmp.lt.s32.totalorder %s25, 0
      %s364 = scalar_select %p363, %s25, 0
      %s365 = smul.addr %s364, 4
      %s366 = scalar_lea.vmem %s2, %s365
      %p367 = scmp.lt.s32.totalorder %s25, 0
      %s368 = scalar_select %p367, %s25, 0
      %s369 = scalar_lea.vmem %s3, %s368
      %s370 = smul.u32 2, %s25
      %p371 = scmp.lt.s32.totalorder %s370, 1
      %s372 = scalar_select %p371, %s370, 1
      %s373 = smul.addr %s372, 4
      %s374 = scalar_lea.vmem %s4, %s373
      %s375 = smul.u32 2, %s25
      %s376 = smul.u32 8, %s24
      %p377 = scmp.lt.s32.totalorder %s376, 15
      %s378 = scalar_select %p377, %s376, 15
      %s379 = smul.addr %s378, 8
      %s380 = scalar_lea.vmem %s7, %s379
      %s381 = smul.u32 8, %s24
      %s382 = smul.u32 8, %s24
      %p383 = scmp.lt.s32.totalorder %s382, 15
      %s384 = scalar_select %p383, %s382, 15
      %s385 = smul.addr %s384, 8
      %s386 = scalar_lea.vmem %s8, %s385
      %s387 = smul.u32 8, %s24
      %p389 = scmp.eq.s32.totalorder %s25, 0
      // Predicated region
      $region49: #{conditional_routed_feedforward.3} parent=47 // pred_check
        %p390 = pneg %p389
      $region50: #{conditional_routed_feedforward.3} parent=47 // pred_check_branch
        %392 = sbr.rel (%p390) target = $region52
      $region51: #{conditional_routed_feedforward.3} parent=47 // pred_region
        %v393 = vld [vmem:[%s361] sm:$0xff]
        %v394 = vld [vmem:[%s361 + $0x8] sm:$0xff]
        %v395 = vld [vmem:[%s361 + $0x10] sm:$0xff]
        %v396 = vld [vmem:[%s361 + $0x18] sm:$0xff]
        %v397 = vld [vmem:[%s361 + $0x20] sm:$0xff]
        %v398 = vld [vmem:[%s361 + $0x28] sm:$0xff]
        %v399 = vld [vmem:[%s361 + $0x30] sm:$0xff]
        %v400 = vld [vmem:[%s361 + $0x38] sm:$0xff]
        %v401 = vld [vmem:[%s6] sm:$0x1]
        %v403 = vlaneseq
        %v404 = vshrl.u32 %v403, 7
        %v405 = vsub.s32 0, %v404
        %v406 = vrot.slane %v401, %v405
        %v408 = vmul.f32 %v393, %v406
        %v409 = vmul.f32 %v394, %v406
        %v410 = vmul.f32 %v395, %v406
        %v411 = vmul.f32 %v396, %v406
        %v412 = vmul.f32 %v397, %v406
        %v413 = vmul.f32 %v398, %v406
        %v414 = vmul.f32 %v399, %v406
        %v415 = vmul.f32 %v400, %v406
        %vm416 = vcmask 261120
        %v417 = vsel %vm416, %v408, 0.0
        %418 = vadd.xlane.f32.xlu0 %v417
        %v419 = vpop.xlane.xlu0 %418
        %v420 = vsel %vm416, %v409, 0.0
        %421 = vadd.xlane.f32.xlu0 %v420
        %v422 = vpop.xlane.xlu0 %421
        %v423 = vsel %vm416, %v410, 0.0
        %424 = vadd.xlane.f32.xlu0 %v423
        %v425 = vpop.xlane.xlu0 %424
        %v426 = vsel %vm416, %v411, 0.0
        %427 = vadd.xlane.f32.xlu0 %v426
        %v428 = vpop.xlane.xlu0 %427
        %v429 = vsel %vm416, %v412, 0.0
        %430 = vadd.xlane.f32.xlu0 %v429
        %v431 = vpop.xlane.xlu0 %430
        %v432 = vsel %vm416, %v413, 0.0
        %433 = vadd.xlane.f32.xlu0 %v432
        %v434 = vpop.xlane.xlu0 %433
        %v435 = vsel %vm416, %v414, 0.0
        %436 = vadd.xlane.f32.xlu0 %v435
        %v437 = vpop.xlane.xlu0 %436
        %v438 = vsel %vm416, %v415, 0.0
        %439 = vadd.xlane.f32.xlu0 %v438
        %v440 = vpop.xlane.xlu0 %439
        %vm441 = vcmask 7168
        %442 = vst.msk [vmem:[%s386] sm:$0xff] %vm441, %v419
        %443 = vst.msk [vmem:[%s386 + $0x8] sm:$0xff] %vm441, %v422
        %444 = vst.msk [vmem:[%s386 + $0x10] sm:$0xff] %vm441, %v425
        %445 = vst.msk [vmem:[%s386 + $0x18] sm:$0xff] %vm441, %v428
        %446 = vst.msk [vmem:[%s386 + $0x20] sm:$0xff] %vm441, %v431
        %447 = vst.msk [vmem:[%s386 + $0x28] sm:$0xff] %vm441, %v434
        %448 = vst.msk [vmem:[%s386 + $0x30] sm:$0xff] %vm441, %v437
        %449 = vst.msk [vmem:[%s386 + $0x38] sm:$0xff] %vm441, %v440
        %v450 = vmul.f32 %v393, %v393
        %v451 = vmul.f32 %v394, %v394
        %v452 = vmul.f32 %v395, %v395
        %v453 = vmul.f32 %v396, %v396
        %v454 = vmul.f32 %v397, %v397
        %v455 = vmul.f32 %v398, %v398
        %v456 = vmul.f32 %v399, %v399
        %v457 = vmul.f32 %v400, %v400
        %v458 = vsel %vm416, %v450, 0.0
        %459 = vadd.xlane.f32.xlu0 %v458
        %v460 = vpop.xlane.xlu0 %459
        %v461 = vsel %vm416, %v451, 0.0
        %462 = vadd.xlane.f32.xlu0 %v461
        %v463 = vpop.xlane.xlu0 %462
        %v464 = vsel %vm416, %v452, 0.0
        %465 = vadd.xlane.f32.xlu0 %v464
        %v466 = vpop.xlane.xlu0 %465
        %v467 = vsel %vm416, %v453, 0.0
        %468 = vadd.xlane.f32.xlu0 %v467
        %v469 = vpop.xlane.xlu0 %468
        %v470 = vsel %vm416, %v454, 0.0
        %471 = vadd.xlane.f32.xlu0 %v470
        %v472 = vpop.xlane.xlu0 %471
        %v473 = vsel %vm416, %v455, 0.0
        %474 = vadd.xlane.f32.xlu0 %v473
        %v475 = vpop.xlane.xlu0 %474
        %v476 = vsel %vm416, %v456, 0.0
        %477 = vadd.xlane.f32.xlu0 %v476
        %v478 = vpop.xlane.xlu0 %477
        %v479 = vsel %vm416, %v457, 0.0
        %480 = vadd.xlane.f32.xlu0 %v479
        %v481 = vpop.xlane.xlu0 %480
        %v482 = vmax.f32 %v460, 1e-24
        %v483 = vmax.f32 %v463, 1e-24
        %v484 = vmax.f32 %v466, 1e-24
        %v485 = vmax.f32 %v469, 1e-24
        %v486 = vmax.f32 %v472, 1e-24
        %v487 = vmax.f32 %v475, 1e-24
        %v488 = vmax.f32 %v478, 1e-24
        %v489 = vmax.f32 %v481, 1e-24
        %v490 = vrsqrt.pop %v482
        %v491 = vrsqrt.pop %v483
        %v492 = vrsqrt.pop %v484
        %v493 = vrsqrt.pop %v485
        %v494 = vrsqrt.pop %v486
        %v495 = vrsqrt.pop %v487
        %v496 = vrsqrt.pop %v488
        %v497 = vrsqrt.pop %v489
        %v498 = vmul.f32 %v393, %v490
        %v499 = vmul.f32 %v394, %v491
        %v500 = vmul.f32 %v395, %v492
        %v501 = vmul.f32 %v396, %v493
        %v502 = vmul.f32 %v397, %v494
        %v503 = vmul.f32 %v398, %v495
        %v504 = vmul.f32 %v399, %v496
        %v505 = vmul.f32 %v400, %v497
        %v506 = vld [vmem:[%s1] sm:$0x1]
        %v508 = vlaneseq
        %v509 = vshrl.u32 %v508, 7
        %v510 = vsub.s32 0, %v509
        %v511 = vrot.slane %v506, %v510
        %v513 = vmul.f32 %v498, %v511
        %v514 = vmul.f32 %v499, %v511
        %v515 = vmul.f32 %v500, %v511
        %v516 = vmul.f32 %v501, %v511
        %v517 = vmul.f32 %v502, %v511
        %v518 = vmul.f32 %v503, %v511
        %v519 = vmul.f32 %v504, %v511
        %v520 = vmul.f32 %v505, %v511
        %v521 = vpack.c.bf16 %v514, %v513
        %v522 = vpack.c.bf16 %v516, %v515
        %v523 = vpack.c.bf16 %v518, %v517
        %v524 = vpack.c.bf16 %v520, %v519
        %v529 = vunpack.c.l.b16 %v521
        %v530 = vunpack.c.h.b16 %v521
        %v531 = vunpack.c.l.b16 %v522
        %v532 = vunpack.c.h.b16 %v522
        %v533 = vunpack.c.l.b16 %v523
        %v534 = vunpack.c.h.b16 %v523
        %v535 = vunpack.c.l.b16 %v524
        %v536 = vunpack.c.h.b16 %v524
        %v537 = vpack.c.b16 %v529, %v529
        %v538 = vpack.c.b16 %v530, %v530
        %v539 = vpack.c.b16 %v531, %v531
        %v540 = vpack.c.b16 %v532, %v532
        %v541 = vpack.c.b16 %v533, %v533
        %v542 = vpack.c.b16 %v534, %v534
        %v543 = vpack.c.b16 %v535, %v535
        %v544 = vpack.c.b16 %v536, %v536
        %vm553 = vcmask 257024
        %554 = vst.msk [vmem:[#allocation2] sm:$0xf] %vm553, %v537
        %555 = vst.msk [vmem:[#allocation2 + $0x4] sm:$0xf] %vm553, %v538
        %556 = vst.msk [vmem:[#allocation2 + $0x8] sm:$0xf] %vm553, %v539
        %557 = vst.msk [vmem:[#allocation2 + $0xc] sm:$0xf] %vm553, %v540
        %558 = vst.msk [vmem:[#allocation2 + $0x10] sm:$0xf] %vm553, %v541
        %559 = vst.msk [vmem:[#allocation2 + $0x14] sm:$0xf] %vm553, %v542
        %560 = vst.msk [vmem:[#allocation2 + $0x18] sm:$0xf] %vm553, %v543
        %561 = vst.msk [vmem:[#allocation2 + $0x1c] sm:$0xf] %vm553, %v544
        %562 = vst.msk [vmem:[#allocation3] sm:$0xff] %vm416, 0.0
        %563 = vst.msk [vmem:[#allocation3 + $0x8] sm:$0xff] %vm416, 0.0
        %564 = vst.msk [vmem:[#allocation3 + $0x10] sm:$0xff] %vm416, 0.0
        %565 = vst.msk [vmem:[#allocation3 + $0x18] sm:$0xff] %vm416, 0.0
        %566 = vst.msk [vmem:[#allocation3 + $0x20] sm:$0xff] %vm416, 0.0
        %567 = vst.msk [vmem:[#allocation3 + $0x28] sm:$0xff] %vm416, 0.0
        %568 = vst.msk [vmem:[#allocation3 + $0x30] sm:$0xff] %vm416, 0.0
        %569 = vst.msk [vmem:[#allocation3 + $0x38] sm:$0xff] %vm416, 0.0
      $region52: #{conditional_routed_feedforward.3} parent=47 // pred_fallthru
        _
      %v570 = vld [vmem:[#allocation2] sm:$0xf]
      %v571 = vld [vmem:[#allocation2 + $0x4] sm:$0xf]
      %v572 = vld [vmem:[#allocation2 + $0x8] sm:$0xf]
      %v573 = vld [vmem:[#allocation2 + $0xc] sm:$0xf]
      %v574 = vld [vmem:[#allocation2 + $0x10] sm:$0xf]
      %v575 = vld [vmem:[#allocation2 + $0x14] sm:$0xf]
      %v576 = vld [vmem:[#allocation2 + $0x18] sm:$0xf]
      %v577 = vld [vmem:[#allocation2 + $0x1c] sm:$0xf]
      %v578 = vld [vmem:[%s366] sm:$0xf]
      %v579 = vld [vmem:[%s366 + $0x4] sm:$0xf]
      %v580 = vld [vmem:[%s366 + $0x8] sm:$0xf]
      %v581 = vld [vmem:[%s366 + $0xc] sm:$0xf]
      %v582 = vld [vmem:[%s369] sm:$0x1]
      %v584 = vlaneseq
      %v585 = vshrl.u32 %v584, 7
      %v586 = vsub.s32 0, %v585
      %v587 = vrot.slane %v582, %v586
      %v597 = vunpack.c.l.b16 %v570
      %v598 = vunpack.c.l.b16 %v571
      %v599 = vunpack.c.l.b16 %v572
      %v600 = vunpack.c.l.b16 %v573
      %v601 = vunpack.c.l.b16 %v574
      %v602 = vunpack.c.l.b16 %v575
      %v603 = vunpack.c.l.b16 %v576
      %v604 = vunpack.c.l.b16 %v577
      %v605 = vpack.c.b16 %v598, %v597
      %v606 = vpack.c.b16 %v600, %v599
      %v607 = vpack.c.b16 %v602, %v601
      %v608 = vpack.c.b16 %v604, %v603
      %v613 = vunpack.c.l.b16 %v578
      %v614 = vunpack.c.l.b16 %v579
      %v615 = vunpack.c.l.b16 %v580
      %v616 = vunpack.c.l.b16 %v581
      %v617 = vpack.c.b16 %v614, %v613
      %v618 = vpack.c.b16 %v616, %v615
      %vm621 = vcmask 261120
      %v623 = vsel %vm621, %v605, 0
      %v626 = vsel %vm621, %v606, 0
      %v629 = vsel %vm621, %v607, 0
      %v632 = vsel %vm621, %v608, 0
      %634 = vmatprep.subr.bf16.mxu0 0
      %635 = vmatpush1.bf16.msra.mxu0 0
      %636 = vmatprep.subr.bf16.mxu0 0
      %637 = vmatpush1.bf16.msra.mxu0 0
      %638 = vmatprep.subr.bf16.mxu0 0
      %639 = vmatpush1.bf16.msra.mxu0 0
      %640 = vmatprep.subr.bf16.mxu0 0
      %641 = vmatpush1.bf16.msra.mxu0 0
      %642 = vmatprep.subr.bf16.mxu0 0
      %643 = vmatpush1.bf16.msra.mxu0 0
      %644 = vmatprep.subr.bf16.mxu0 0
      %645 = vmatpush1.bf16.msra.mxu0 0
      %646 = vmatprep.subr.bf16.mxu0 0
      %647 = vmatpush1.bf16.msra.mxu0 %v618
      %648 = vmatprep.subr.bf16.mxu0 0
      %649 = vmatpush1.bf16.msra.mxu0 %v617
      %650 = vmatprep.subr.bf16.mxu0 0
      %651 = vmatpush2.bf16.msra.mxu0 0
      %652 = vmatprep.subr.bf16.mxu0 0
      %653 = vmatpush2.bf16.msra.mxu0 0
      %654 = vmatprep.subr.bf16.mxu0 0
      %655 = vmatpush2.bf16.msra.mxu0 0
      %656 = vmatprep.subr.bf16.mxu0 0
      %657 = vmatpush2.bf16.msra.mxu0 0
      %658 = vmatprep.subr.bf16.mxu0 0
      %659 = vmatpush2.bf16.msra.mxu0 0
      %660 = vmatprep.subr.bf16.mxu0 0
      %661 = vmatpush2.bf16.msra.mxu0 0
      %662 = vmatprep.subr.bf16.mxu0 0
      %663 = vmatpush2.bf16.msra.mxu0 0
      %664 = vmatprep.subr.bf16.mxu0 0
      %665 = vmatpush2.bf16.msra.mxu0 0
      %666 = vmatprep.mubr.bf16.mxu0 0
      %667 = vmatmul.mubr.bf16.gmra.mxu0 %v623
      %v668 = vpop.f32.mrf.mxu0
      %v669 = vadd.f32 %v587, %v668
      %v670 = vpop.f32.mrf.mxu0
      %v671 = vpop.f32.mrf.mxu0
      %v672 = vadd.f32 %v587, %v671
      %v673 = vpop.f32.mrf.mxu0
      %674 = vmatprep.mubr.bf16.mxu0 0
      %675 = vmatmul.mubr.bf16.gmra.mxu0 %v626
      %v676 = vpop.f32.mrf.mxu0
      %v677 = vadd.f32 %v587, %v676
      %v678 = vpop.f32.mrf.mxu0
      %v679 = vpop.f32.mrf.mxu0
      %v680 = vadd.f32 %v587, %v679
      %v681 = vpop.f32.mrf.mxu0
      %682 = vmatprep.mubr.bf16.mxu0 0
      %683 = vmatmul.mubr.bf16.gmra.mxu0 %v629
      %v684 = vpop.f32.mrf.mxu0
      %v685 = vadd.f32 %v587, %v684
      %v686 = vpop.f32.mrf.mxu0
      %v687 = vpop.f32.mrf.mxu0
      %v688 = vadd.f32 %v587, %v687
      %v689 = vpop.f32.mrf.mxu0
      %690 = vmatprep.mubr.bf16.mxu0 0
      %691 = vmatmul.mubr.bf16.gmra.mxu0 %v632
      %v692 = vpop.f32.mrf.mxu0
      %v693 = vadd.f32 %v587, %v692
      %v694 = vpop.f32.mrf.mxu0
      %v695 = vpop.f32.mrf.mxu0
      %v696 = vadd.f32 %v587, %v695
      %v697 = vpop.f32.mrf.mxu0
      %698 = vdwg.mxu0
      %v699 = vmul.f32 %v669, 0.70710677
      %v700 = vmul.f32 %v672, 0.70710677
      %v701 = vmul.f32 %v677, 0.70710677
      %v702 = vmul.f32 %v680, 0.70710677
      %v703 = vmul.f32 %v685, 0.70710677
      %v704 = vmul.f32 %v688, 0.70710677
      %v705 = vmul.f32 %v693, 0.70710677
      %v706 = vmul.f32 %v696, 0.70710677
      %v707 = vand.u32 2147483647, %v699
      %v708 = vand.u32 2147483647, %v700
      %v709 = vand.u32 2147483647, %v701
      %v710 = vand.u32 2147483647, %v702
      %v711 = vand.u32 2147483647, %v703
      %v712 = vand.u32 2147483647, %v704
      %v713 = vand.u32 2147483647, %v705
      %v714 = vand.u32 2147483647, %v706
      %v715 = vmul.f32 %v707, 0.3275911
      %v716 = vmul.f32 %v708, 0.3275911
      %v717 = vmul.f32 %v709, 0.3275911
      %v718 = vmul.f32 %v710, 0.3275911
      %v719 = vmul.f32 %v711, 0.3275911
      %v720 = vmul.f32 %v712, 0.3275911
      %v721 = vmul.f32 %v713, 0.3275911
      %v722 = vmul.f32 %v714, 0.3275911
      %v723 = vadd.f32 %v715, 1.0
      %v724 = vadd.f32 %v716, 1.0
      %v725 = vadd.f32 %v717, 1.0
      %v726 = vadd.f32 %v718, 1.0
      %v727 = vadd.f32 %v719, 1.0
      %v728 = vadd.f32 %v720, 1.0
      %v729 = vadd.f32 %v721, 1.0
      %v730 = vadd.f32 %v722, 1.0
      %v731 = vrcp.pop %v723
      %v732 = vrcp.pop %v724
      %v733 = vrcp.pop %v725
      %v734 = vrcp.pop %v726
      %v735 = vrcp.pop %v727
      %v736 = vrcp.pop %v728
      %v737 = vrcp.pop %v729
      %v738 = vrcp.pop %v730
      %v739 = vmul.f32 %v731, 1.0614054
      %v740 = vmul.f32 %v732, 1.0614054
      %v741 = vmul.f32 %v733, 1.0614054
      %v742 = vmul.f32 %v734, 1.0614054
      %v743 = vmul.f32 %v735, 1.0614054
      %v744 = vmul.f32 %v736, 1.0614054
      %v745 = vmul.f32 %v737, 1.0614054
      %v746 = vmul.f32 %v738, 1.0614054
      %v747 = vadd.f32 %v739, -1.4531521
      %v748 = vadd.f32 %v740, -1.4531521
      %v749 = vadd.f32 %v741, -1.4531521
      %v750 = vadd.f32 %v742, -1.4531521
      %v751 = vadd.f32 %v743, -1.4531521
      %v752 = vadd.f32 %v744, -1.4531521
      %v753 = vadd.f32 %v745, -1.4531521
      %v754 = vadd.f32 %v746, -1.4531521
      %v755 = vmul.f32 %v731, %v747
      %v756 = vmul.f32 %v732, %v748
      %v757 = vmul.f32 %v733, %v749
      %v758 = vmul.f32 %v734, %v750
      %v759 = vmul.f32 %v735, %v751
      %v760 = vmul.f32 %v736, %v752
      %v761 = vmul.f32 %v737, %v753
      %v762 = vmul.f32 %v738, %v754
      %v763 = vadd.f32 %v755, 1.4214138
      %v764 = vadd.f32 %v756, 1.4214138
      %v765 = vadd.f32 %v757, 1.4214138
      %v766 = vadd.f32 %v758, 1.4214138
      %v767 = vadd.f32 %v759, 1.4214138
      %v768 = vadd.f32 %v760, 1.4214138
      %v769 = vadd.f32 %v761, 1.4214138
      %v770 = vadd.f32 %v762, 1.4214138
      %v771 = vmul.f32 %v731, %v763
      %v772 = vmul.f32 %v732, %v764
      %v773 = vmul.f32 %v733, %v765
      %v774 = vmul.f32 %v734, %v766
      %v775 = vmul.f32 %v735, %v767
      %v776 = vmul.f32 %v736, %v768
      %v777 = vmul.f32 %v737, %v769
      %v778 = vmul.f32 %v738, %v770
      %v779 = vadd.f32 %v771, -0.28449672
      %v780 = vadd.f32 %v772, -0.28449672
      %v781 = vadd.f32 %v773, -0.28449672
      %v782 = vadd.f32 %v774, -0.28449672
      %v783 = vadd.f32 %v775, -0.28449672
      %v784 = vadd.f32 %v776, -0.28449672
      %v785 = vadd.f32 %v777, -0.28449672
      %v786 = vadd.f32 %v778, -0.28449672
      %v787 = vmul.f32 %v731, %v779
      %v788 = vmul.f32 %v732, %v780
      %v789 = vmul.f32 %v733, %v781
      %v790 = vmul.f32 %v734, %v782
      %v791 = vmul.f32 %v735, %v783
      %v792 = vmul.f32 %v736, %v784
      %v793 = vmul.f32 %v737, %v785
      %v794 = vmul.f32 %v738, %v786
      %v795 = vadd.f32 %v787, 0.2548296
      %v796 = vadd.f32 %v788, 0.2548296
      %v797 = vadd.f32 %v789, 0.2548296
      %v798 = vadd.f32 %v790, 0.2548296
      %v799 = vadd.f32 %v791, 0.2548296
      %v800 = vadd.f32 %v792, 0.2548296
      %v801 = vadd.f32 %v793, 0.2548296
      %v802 = vadd.f32 %v794, 0.2548296
      %v803 = vmul.f32 %v731, %v795
      %v804 = vmul.f32 %v732, %v796
      %v805 = vmul.f32 %v733, %v797
      %v806 = vmul.f32 %v734, %v798
      %v807 = vmul.f32 %v735, %v799
      %v808 = vmul.f32 %v736, %v800
      %v809 = vmul.f32 %v737, %v801
      %v810 = vmul.f32 %v738, %v802
      %v811 = vsub.f32 0.0, %v707
      %v812 = vsub.f32 0.0, %v708
      %v813 = vsub.f32 0.0, %v709
      %v814 = vsub.f32 0.0, %v710
      %v815 = vsub.f32 0.0, %v711
      %v816 = vsub.f32 0.0, %v712
      %v817 = vsub.f32 0.0, %v713
      %v818 = vsub.f32 0.0, %v714
      %v819 = vmul.f32 %v811, %v707
      %v820 = vmul.f32 %v812, %v708
      %v821 = vmul.f32 %v813, %v709
      %v822 = vmul.f32 %v814, %v710
      %v823 = vmul.f32 %v815, %v711
      %v824 = vmul.f32 %v816, %v712
      %v825 = vmul.f32 %v817, %v713
      %v826 = vmul.f32 %v818, %v714
      %v827 = vmul.f32 %v819, 1.442695
      %v828 = vpow.pop %v827
      %v829 = vmul.f32 %v820, 1.442695
      %v830 = vpow.pop %v829
      %v831 = vmul.f32 %v821, 1.442695
      %v832 = vpow.pop %v831
      %v833 = vmul.f32 %v822, 1.442695
      %v834 = vpow.pop %v833
      %v835 = vmul.f32 %v823, 1.442695
      %v836 = vpow.pop %v835
      %v837 = vmul.f32 %v824, 1.442695
      %v838 = vpow.pop %v837
      %v839 = vmul.f32 %v825, 1.442695
      %v840 = vpow.pop %v839
      %v841 = vmul.f32 %v826, 1.442695
      %v842 = vpow.pop %v841
      %v843 = vmul.f32 %v803, %v828
      %v844 = vmul.f32 %v804, %v830
      %v845 = vmul.f32 %v805, %v832
      %v846 = vmul.f32 %v806, %v834
      %v847 = vmul.f32 %v807, %v836
      %v848 = vmul.f32 %v808, %v838
      %v849 = vmul.f32 %v809, %v840
      %v850 = vmul.f32 %v810, %v842
      %v851 = vsub.f32 1.0, %v843
      %v852 = vsub.f32 1.0, %v844
      %v853 = vsub.f32 1.0, %v845
      %v854 = vsub.f32 1.0, %v846
      %v855 = vsub.f32 1.0, %v847
      %v856 = vsub.f32 1.0, %v848
      %v857 = vsub.f32 1.0, %v849
      %v858 = vsub.f32 1.0, %v850
      %vm859 = vcmp.lt.f32.partialorder %v699, 0.0
      %vm860 = vcmp.lt.f32.partialorder %v700, 0.0
      %vm861 = vcmp.lt.f32.partialorder %v701, 0.0
      %vm862 = vcmp.lt.f32.partialorder %v702, 0.0
      %vm863 = vcmp.lt.f32.partialorder %v703, 0.0
      %vm864 = vcmp.lt.f32.partialorder %v704, 0.0
      %vm865 = vcmp.lt.f32.partialorder %v705, 0.0
      %vm866 = vcmp.lt.f32.partialorder %v706, 0.0
      %v867 = vsub.f32 0.0, %v851
      %v868 = vsub.f32 0.0, %v852
      %v869 = vsub.f32 0.0, %v853
      %v870 = vsub.f32 0.0, %v854
      %v871 = vsub.f32 0.0, %v855
      %v872 = vsub.f32 0.0, %v856
      %v873 = vsub.f32 0.0, %v857
      %v874 = vsub.f32 0.0, %v858
      %v875 = vsel %vm859, %v867, %v851
      %v876 = vsel %vm860, %v868, %v852
      %v877 = vsel %vm861, %v869, %v853
      %v878 = vsel %vm862, %v870, %v854
      %v879 = vsel %vm863, %v871, %v855
      %v880 = vsel %vm864, %v872, %v856
      %v881 = vsel %vm865, %v873, %v857
      %v882 = vsel %vm866, %v874, %v858
      %v883 = vmul.f32 %v669, 0.5
      %v884 = vmul.f32 %v672, 0.5
      %v885 = vmul.f32 %v677, 0.5
      %v886 = vmul.f32 %v680, 0.5
      %v887 = vmul.f32 %v685, 0.5
      %v888 = vmul.f32 %v688, 0.5
      %v889 = vmul.f32 %v693, 0.5
      %v890 = vmul.f32 %v696, 0.5
      %v891 = vadd.f32 %v875, 1.0
      %v892 = vadd.f32 %v876, 1.0
      %v893 = vadd.f32 %v877, 1.0
      %v894 = vadd.f32 %v878, 1.0
      %v895 = vadd.f32 %v879, 1.0
      %v896 = vadd.f32 %v880, 1.0
      %v897 = vadd.f32 %v881, 1.0
      %v898 = vadd.f32 %v882, 1.0
      %v899 = vmul.f32 %v883, %v891
      %v900 = vmul.f32 %v884, %v892
      %v901 = vmul.f32 %v885, %v893
      %v902 = vmul.f32 %v886, %v894
      %v903 = vmul.f32 %v887, %v895
      %v904 = vmul.f32 %v888, %v896
      %v905 = vmul.f32 %v889, %v897
      %v906 = vmul.f32 %v890, %v898
      %v907 = vld [vmem:[#allocation3] sm:$0xff]
      %v908 = vld [vmem:[#allocation3 + $0x8] sm:$0xff]
      %v909 = vld [vmem:[#allocation3 + $0x10] sm:$0xff]
      %v910 = vld [vmem:[#allocation3 + $0x18] sm:$0xff]
      %v911 = vld [vmem:[#allocation3 + $0x20] sm:$0xff]
      %v912 = vld [vmem:[#allocation3 + $0x28] sm:$0xff]
      %v913 = vld [vmem:[#allocation3 + $0x30] sm:$0xff]
      %v914 = vld [vmem:[#allocation3 + $0x38] sm:$0xff]
      %v915 = vpack.c.bf16 %v900, %v899
      %v916 = vpack.c.bf16 %v902, %v901
      %v917 = vpack.c.bf16 %v904, %v903
      %v918 = vpack.c.bf16 %v906, %v905
      %v919 = vld [vmem:[%s374] sm:$0xf]
      %v920 = vld [vmem:[%s374 + $0x4] sm:$0xf]
      %v923 = vunpack.c.l.b16 %v919
      %v924 = vunpack.c.l.b16 %v920
      %v925 = vpack.c.b16 %v924, %v923
      %vm927 = vcmask 130048
      %v929 = vsel %vm927, %v915, 0
      %v932 = vsel %vm927, %v916, 0
      %v935 = vsel %vm927, %v917, 0
      %v938 = vsel %vm927, %v918, 0
      %940 = vmatprep.subr.bf16.mxu0 0
      %941 = vmatpush1.bf16.msra.mxu0 0
      %942 = vmatprep.subr.bf16.mxu0 0
      %943 = vmatpush1.bf16.msra.mxu0 0
      %944 = vmatprep.subr.bf16.mxu0 0
      %945 = vmatpush1.bf16.msra.mxu0 0
      %946 = vmatprep.subr.bf16.mxu0 0
      %947 = vmatpush1.bf16.msra.mxu0 0
      %948 = vmatprep.subr.bf16.mxu0 0
      %949 = vmatpush1.bf16.msra.mxu0 0
      %950 = vmatprep.subr.bf16.mxu0 0
      %951 = vmatpush1.bf16.msra.mxu0 0
      %952 = vmatprep.subr.bf16.mxu0 0
      %953 = vmatpush1.bf16.msra.mxu0 0
      %954 = vmatprep.subr.bf16.mxu0 0
      %955 = vmatpush1.bf16.msra.mxu0 %v925
      %956 = vmatprep.subr.bf16.mxu0 0
      %957 = vmatpush2.bf16.msra.mxu0 0
      %958 = vmatprep.subr.bf16.mxu0 0
      %959 = vmatpush2.bf16.msra.mxu0 0
      %960 = vmatprep.subr.bf16.mxu0 0
      %961 = vmatpush2.bf16.msra.mxu0 0
      %962 = vmatprep.subr.bf16.mxu0 0
      %963 = vmatpush2.bf16.msra.mxu0 0
      %964 = vmatprep.subr.bf16.mxu0 0
      %965 = vmatpush2.bf16.msra.mxu0 0
      %966 = vmatprep.subr.bf16.mxu0 0
      %967 = vmatpush2.bf16.msra.mxu0 0
      %968 = vmatprep.subr.bf16.mxu0 0
      %969 = vmatpush2.bf16.msra.mxu0 0
      %970 = vmatprep.subr.bf16.mxu0 0
      %971 = vmatpush2.bf16.msra.mxu0 0
      %972 = vmatprep.mubr.bf16.mxu0 0
      %973 = vmatmul.mubr.bf16.gmra.mxu0 %v929
      %v974 = vpop.f32.mrf.mxu0
      %v975 = vadd.f32 0.0, %v974
      %v976 = vpop.f32.mrf.mxu0
      %v977 = vpop.f32.mrf.mxu0
      %v978 = vadd.f32 0.0, %v977
      %v979 = vpop.f32.mrf.mxu0
      %980 = vmatprep.mubr.bf16.mxu0 0
      %981 = vmatmul.mubr.bf16.gmra.mxu0 %v932
      %v982 = vpop.f32.mrf.mxu0
      %v983 = vadd.f32 0.0, %v982
      %v984 = vpop.f32.mrf.mxu0
      %v985 = vpop.f32.mrf.mxu0
      %v986 = vadd.f32 0.0, %v985
      %v987 = vpop.f32.mrf.mxu0
      %988 = vmatprep.mubr.bf16.mxu0 0
      %989 = vmatmul.mubr.bf16.gmra.mxu0 %v935
      %v990 = vpop.f32.mrf.mxu0
      %v991 = vadd.f32 0.0, %v990
      %v992 = vpop.f32.mrf.mxu0
      %v993 = vpop.f32.mrf.mxu0
      %v994 = vadd.f32 0.0, %v993
      %v995 = vpop.f32.mrf.mxu0
      %996 = vmatprep.mubr.bf16.mxu0 0
      %997 = vmatmul.mubr.bf16.gmra.mxu0 %v938
      %v998 = vpop.f32.mrf.mxu0
      %v999 = vadd.f32 0.0, %v998
      %v1000 = vpop.f32.mrf.mxu0
      %v1001 = vpop.f32.mrf.mxu0
      %v1002 = vadd.f32 0.0, %v1001
      %v1003 = vpop.f32.mrf.mxu0
      %1004 = vdwg.mxu0
      %v1005 = vadd.f32 %v907, %v975
      %v1006 = vadd.f32 %v908, %v978
      %v1007 = vadd.f32 %v909, %v983
      %v1008 = vadd.f32 %v910, %v986
      %v1009 = vadd.f32 %v911, %v991
      %v1010 = vadd.f32 %v912, %v994
      %v1011 = vadd.f32 %v913, %v999
      %v1012 = vadd.f32 %v914, %v1002
      %1013 = vst.msk [vmem:[#allocation3] sm:$0xff] %vm621, %v1005
      %1014 = vst.msk [vmem:[#allocation3 + $0x8] sm:$0xff] %vm621, %v1006
      %1015 = vst.msk [vmem:[#allocation3 + $0x10] sm:$0xff] %vm621, %v1007
      %1016 = vst.msk [vmem:[#allocation3 + $0x18] sm:$0xff] %vm621, %v1008
      %1017 = vst.msk [vmem:[#allocation3 + $0x20] sm:$0xff] %vm621, %v1009
      %1018 = vst.msk [vmem:[#allocation3 + $0x28] sm:$0xff] %vm621, %v1010
      %1019 = vst.msk [vmem:[#allocation3 + $0x30] sm:$0xff] %vm621, %v1011
      %1020 = vst.msk [vmem:[#allocation3 + $0x38] sm:$0xff] %vm621, %v1012
      // Predicated region
      $region53: #{conditional_routed_feedforward.3} parent=47 // pred_check
        %p1021 = pneg %p389
      $region54: #{conditional_routed_feedforward.3} parent=47 // pred_check_branch
        %1023 = sbr.rel (%p1021) target = $region56
      $region55: #{conditional_routed_feedforward.3} parent=47 // pred_region
        %v1024 = vld [vmem:[#allocation3] sm:$0xff]
        %v1025 = vld [vmem:[#allocation3 + $0x8] sm:$0xff]
        %v1026 = vld [vmem:[#allocation3 + $0x10] sm:$0xff]
        %v1027 = vld [vmem:[#allocation3 + $0x18] sm:$0xff]
        %v1028 = vld [vmem:[#allocation3 + $0x20] sm:$0xff]
        %v1029 = vld [vmem:[#allocation3 + $0x28] sm:$0xff]
        %v1030 = vld [vmem:[#allocation3 + $0x30] sm:$0xff]
        %v1031 = vld [vmem:[#allocation3 + $0x38] sm:$0xff]
        %v1032 = vld [vmem:[%s5] sm:$0x1]
        %v1034 = vlaneseq
        %v1035 = vshrl.u32 %v1034, 7
        %v1036 = vsub.s32 0, %v1035
        %v1037 = vrot.slane %v1032, %v1036
        %v1039 = vadd.f32 %v1024, %v1037
        %v1040 = vadd.f32 %v1025, %v1037
        %v1041 = vadd.f32 %v1026, %v1037
        %v1042 = vadd.f32 %v1027, %v1037
        %v1043 = vadd.f32 %v1028, %v1037
        %v1044 = vadd.f32 %v1029, %v1037
        %v1045 = vadd.f32 %v1030, %v1037
        %v1046 = vadd.f32 %v1031, %v1037
        %1047 = vst.msk [vmem:[%s380] sm:$0xff] %vm621, %v1039
        %1048 = vst.msk [vmem:[%s380 + $0x8] sm:$0xff] %vm621, %v1040
        %1049 = vst.msk [vmem:[%s380 + $0x10] sm:$0xff] %vm621, %v1041
        %1050 = vst.msk [vmem:[%s380 + $0x18] sm:$0xff] %vm621, %v1042
        %1051 = vst.msk [vmem:[%s380 + $0x20] sm:$0xff] %vm621, %v1043
        %1052 = vst.msk [vmem:[%s380 + $0x28] sm:$0xff] %vm621, %v1044
        %1053 = vst.msk [vmem:[%s380 + $0x30] sm:$0xff] %vm621, %v1045
        %1054 = vst.msk [vmem:[%s380 + $0x38] sm:$0xff] %vm621, %v1046
      $region56: #{conditional_routed_feedforward.3} parent=47 // pred_fallthru
        _
      %s1055 = smul.u32 8, %s24
      %p1056 = scmp.lt.s32.totalorder %s1055, 15
      %s1057 = scalar_select %p1056, %s1055, 15
      %s1058 = smul.addr %s1057, 8
      %s1059 = scalar_lea.vmem %s7, %s1058
      %s1060 = smul.u32 8, %s24
      %p1061 = scmp.lt.s32.totalorder %s1060, 15
      %s1062 = scalar_select %p1061, %s1060, 15
      %s1063 = smul.addr %s1062, 8
      %s1064 = scalar_lea.vmem %s8, %s1063
      // Predicated region
      $region57: #{conditional_routed_feedforward.3} parent=47 // pred_check
        %p1065 = pneg %p217
      $region58: #{conditional_routed_feedforward.3} parent=47 // pred_check_branch
        %1067 = sbr.rel (%p1065) target = $region60
      $region59: #{conditional_routed_feedforward.3} parent=47 // pred_region
        %s1068 = smul.u32 8, %s24
      $region60: #{conditional_routed_feedforward.3} parent=47 // pred_fallthru
        _
      // Predicated region
      $region61: #{conditional_routed_feedforward.3} parent=47 // pred_check
        %p1069 = pneg %p243
      $region62: #{conditional_routed_feedforward.3} parent=47 // pred_check_branch
        %1071 = sbr.rel (%p1069) target = $region64
      $region63: #{conditional_routed_feedforward.3} parent=47 // pred_region
        %s1072 = smul.u32 8, %s24
      $region64: #{conditional_routed_feedforward.3} parent=47 // pred_fallthru
        _
    $region48: #{conditional_routed_feedforward.3} parent=5 // pred_fallthru
      _
    %p1073 = scmp.le.s32.totalorder 2, %s15
    // Predicated region
    $region65: #{conditional_routed_feedforward.3} parent=5 // pred_check
      %p1074 = pneg %p1073
    $region66: #{conditional_routed_feedforward.3} parent=5 // pred_check_branch
      %1076 = sbr.rel (%p1074) target = $region68
    $region67: #{conditional_routed_feedforward.3} parent=5 // pred_region
      %s1077 = ssub.s32 %s15, 2
      // Predicated region
      $region69: #{conditional_routed_feedforward.3} parent=67 // pred_check
        %p1078 = pneg %p223
      $region70: #{conditional_routed_feedforward.3} parent=67 // pred_check_branch
        %1080 = sbr.rel (%p1078) target = $region72
      $region71: #{conditional_routed_feedforward.3} parent=67 // pred_region
        %s1081 = smul.u32 8, %s26
        %p1082 = scmp.lt.s32.totalorder %s1081, 15
        %s1083 = scalar_select %p1082, %s1081, 15
        %s1084 = smul.addr %s1083, 8
        %s1085 = scalar_lea.vmem %s7, %s1084
      $region72: #{conditional_routed_feedforward.3} parent=67 // pred_fallthru
        _
      // Predicated region
      $region73: #{conditional_routed_feedforward.3} parent=67 // pred_check
        %p1086 = pneg %p249
      $region74: #{conditional_routed_feedforward.3} parent=67 // pred_check_branch
        %1088 = sbr.rel (%p1086) target = $region76
      $region75: #{conditional_routed_feedforward.3} parent=67 // pred_region
        %s1089 = smul.u32 8, %s26
        %p1090 = scmp.lt.s32.totalorder %s1089, 15
        %s1091 = scalar_select %p1090, %s1089, 15
        %s1092 = smul.addr %s1091, 8
        %s1093 = scalar_lea.vmem %s8, %s1092
      $region76: #{conditional_routed_feedforward.3} parent=67 // pred_fallthru
        _
    $region68: #{conditional_routed_feedforward.3} parent=5 // pred_fallthru
      _
  $region6: #{conditional_routed_feedforward.3} parent=0 // loop_footer
    %s19 = sadd.s32 1, %s15
  $region7: #{conditional_routed_feedforward.3} parent=0 // loop_footer_branch
    %14 = sbr.rel target = $region3
  $region8: #{conditional_routed_feedforward.3} parent=0 // loop_exit
    _

// kernel: conditional_routed_feedforward.5
$region0: #{conditional_routed_feedforward.5}
  #allocation0 [shape = 'u32[]', space=smem, size = 0x4, offset = 0x4, fixed_abs, tag = 'smem constant byte address 0x4 - core index']
  #allocation1 [shape = 'u32[144,128]{1,0:T(1,128)}', space=vmem, size = 0x12000, scoped, tag = 'internal scratch']
  #allocation2 [shape = 'bf16[8,32]{1,0:T(8,128)(2,1)}', space=vmem, size = 0x800, scoped, tag = 'scratch operand']
  #allocation3 [shape = 'f32[8,32]{1,0:T(8,128)}', space=vmem, size = 0x1000, scoped, tag = 'scratch operand']
  %s0 = inlined_call_operand.vmem [shape: f32[16,32], index: 0, kind: input, shape index: {}]
  %s1 = inlined_call_operand.vmem [shape: f32[1,32], index: 1, kind: input, shape index: {}]
  %s2 = inlined_call_operand.vmem [shape: bf16[32,128], index: 2, kind: input, shape index: {}]
  %s3 = inlined_call_operand.vmem [shape: f32[1,128], index: 3, kind: input, shape index: {}]
  %s4 = inlined_call_operand.vmem [shape: bf16[128,32], index: 4, kind: input, shape index: {}]
  %s5 = inlined_call_operand.vmem [shape: f32[1,32], index: 5, kind: input, shape index: {}]
  %s6 = inlined_call_operand.vmem [shape: f32[16,32], index: 6, kind: output, shape index: {}]
  %s7 = sld [smem:[#allocation0]]
  $region65: #{conditional_routed_feedforward.5} parent=0
    _
  %s9 = ssub.s32 1, %s7
  %s10 = scalar_select 0, %s9, %s7
  loop: start=0, step=1, limit=4
  $region2: #{conditional_routed_feedforward.5} parent=0 // loop_pre_header
    _
  $region3: #{conditional_routed_feedforward.5} parent=0 // loop_header
    %s12 = sphi 0, %s16
    %p13 = scmp.ge.s32.totalorder %s12, 4
    %s19 = sphi 0, %s31
    %s20 = sphi 0, %s27
    %s21 = sphi 0, %s19
    %s22 = sphi 0, %s20
    %s23 = sphi 0, %s21
    %s24 = sphi 0, %s22
    %s34 = sphi 0, %s36
    %s37 = sphi 0, %s34
    %s38 = sphi 0, %s37
    %s54 = sphi 0, %s38
    %s58 = sphi 0, %s58
    %s60 = sphi 0, %s58
    %s61 = sphi 0, %s60
    %s75 = sphi 0, %s61
    %s81 = sphi 0, %s83
    %s84 = sphi 0, %s81
    %s85 = sphi 0, %s84
    %s101 = sphi 0, %s85
    %s107 = sphi 0, %s109
    %s110 = sphi 0, %s107
    %s111 = sphi 0, %s110
    %s127 = sphi 0, %s111
    %s133 = sphi 0, %s135
    %s136 = sphi 0, %s133
    %s137 = sphi 0, %s136
    %s153 = sphi 0, %s137
    %s157 = sphi 0, %s157
    %s159 = sphi 0, %s157
    %s160 = sphi 0, %s159
    %s174 = sphi 0, %s160
    %s180 = sphi 0, %s182
    %s183 = sphi 0, %s180
    %s184 = sphi 0, %s183
    %s200 = sphi 0, %s184
  $region4: #{conditional_routed_feedforward.5} parent=0 // loop_header_branch
    %15 = sbr.rel (%p13) target = $region8
  $region5: #{conditional_routed_feedforward.5} parent=0 // loop_body
    %s17 = ssub.s32 %s12, 1
    %s18 = ssub.s32 %s12, 2
    %s25 = sadd.s32 1, %s20
    %p26 = scmp.ge.s32.totalorder %s25, 1
    %s27 = scalar_select %p26, 0, %s25
    %s28 = sadd.s32 1, %s19
    %s29 = scalar_select %p26, %s28, %s19
    %p30 = scmp.ge.s32.totalorder %s29, 2
    %s31 = scalar_select %p30, 0, %s29
    %s32 = ssub.s32 %s19, %s31
    %p33 = scmp.eq.s32.totalorder %s32, 0
    %s35 = sadd.s32 %s34, 1
    %s36 = scalar_select %p33, %s34, %s35
    %p39 = pneg %p33
    %p40 = scmp.eq.s32.totalorder %s12, 1
    %p41 = por %p39, %p40
    %p42 = scmp.ne.s32.totalorder %s34, %s37
    %p43 = scmp.eq.s32.totalorder %s12, 0
    %p44 = por %p42, %p43
    %p45 = scmp.ne.s32.totalorder %s34, %s37
    %p46 = scmp.eq.s32.totalorder %s17, 1
    %p47 = por %p45, %p46
    %p48 = scmp.ne.s32.totalorder %s37, %s38
    %p49 = scmp.eq.s32.totalorder %s17, 0
    %p50 = por %p48, %p49
    %p51 = scmp.ne.s32.totalorder %s37, %s38
    %p52 = scmp.eq.s32.totalorder %s18, 1
    %p53 = por %p51, %p52
    %p55 = scmp.ne.s32.totalorder %s38, %s54
    %p56 = scmp.eq.s32.totalorder %s18, 0
    %p57 = por %p55, %p56
    %s59 = sadd.s32 %s58, 1
    %p62 = scmp.eq.s32.totalorder %s12, 1
    %p63 = scmp.ne.s32.totalorder %s58, %s60
    %p64 = scmp.eq.s32.totalorder %s12, 0
    %p65 = por %p63, %p64
    %p66 = scmp.ne.s32.totalorder %s58, %s60
    %p67 = scmp.eq.s32.totalorder %s17, 1
    %p68 = por %p66, %p67
    %p69 = scmp.ne.s32.totalorder %s60, %s61
    %p70 = scmp.eq.s32.totalorder %s17, 0
    %p71 = por %p69, %p70
    %p72 = scmp.ne.s32.totalorder %s60, %s61
    %p73 = scmp.eq.s32.totalorder %s18, 1
    %p74 = por %p72, %p73
    %p76 = scmp.ne.s32.totalorder %s61, %s75
    %p77 = scmp.eq.s32.totalorder %s18, 0
    %p78 = por %p76, %p77
    %s79 = ssub.s32 %s20, %s27
    %p80 = scmp.eq.s32.totalorder %s79, 0
    %s82 = sadd.s32 %s81, 1
    %s83 = scalar_select %p80, %s81, %s82
    %p86 = pneg %p80
    %p87 = scmp.eq.s32.totalorder %s12, 1
    %p88 = por %p86, %p87
    %p89 = scmp.ne.s32.totalorder %s81, %s84
    %p90 = scmp.eq.s32.totalorder %s12, 0
    %p91 = por %p89, %p90
    %p92 = scmp.ne.s32.totalorder %s81, %s84
    %p93 = scmp.eq.s32.totalorder %s17, 1
    %p94 = por %p92, %p93
    %p95 = scmp.ne.s32.totalorder %s84, %s85
    %p96 = scmp.eq.s32.totalorder %s17, 0
    %p97 = por %p95, %p96
    %p98 = scmp.ne.s32.totalorder %s84, %s85
    %p99 = scmp.eq.s32.totalorder %s18, 1
    %p100 = por %p98, %p99
    %p102 = scmp.ne.s32.totalorder %s85, %s101
    %p103 = scmp.eq.s32.totalorder %s18, 0
    %p104 = por %p102, %p103
    %s105 = ssub.s32 %s20, %s27
    %p106 = scmp.eq.s32.totalorder %s105, 0
    %s108 = sadd.s32 %s107, 1
    %s109 = scalar_select %p106, %s107, %s108
    %p112 = pneg %p106
    %p113 = scmp.eq.s32.totalorder %s12, 1
    %p114 = por %p112, %p113
    %p115 = scmp.ne.s32.totalorder %s107, %s110
    %p116 = scmp.eq.s32.totalorder %s12, 0
    %p117 = por %p115, %p116
    %p118 = scmp.ne.s32.totalorder %s107, %s110
    %p119 = scmp.eq.s32.totalorder %s17, 1
    %p120 = por %p118, %p119
    %p121 = scmp.ne.s32.totalorder %s110, %s111
    %p122 = scmp.eq.s32.totalorder %s17, 0
    %p123 = por %p121, %p122
    %p124 = scmp.ne.s32.totalorder %s110, %s111
    %p125 = scmp.eq.s32.totalorder %s18, 1
    %p126 = por %p124, %p125
    %p128 = scmp.ne.s32.totalorder %s111, %s127
    %p129 = scmp.eq.s32.totalorder %s18, 0
    %p130 = por %p128, %p129
    %s131 = ssub.s32 %s20, %s27
    %p132 = scmp.eq.s32.totalorder %s131, 0
    %s134 = sadd.s32 %s133, 1
    %s135 = scalar_select %p132, %s133, %s134
    %p138 = pneg %p132
    %p139 = scmp.eq.s32.totalorder %s12, 1
    %p140 = por %p138, %p139
    %p141 = scmp.ne.s32.totalorder %s133, %s136
    %p142 = scmp.eq.s32.totalorder %s12, 0
    %p143 = por %p141, %p142
    %p144 = scmp.ne.s32.totalorder %s133, %s136
    %p145 = scmp.eq.s32.totalorder %s17, 1
    %p146 = por %p144, %p145
    %p147 = scmp.ne.s32.totalorder %s136, %s137
    %p148 = scmp.eq.s32.totalorder %s17, 0
    %p149 = por %p147, %p148
    %p150 = scmp.ne.s32.totalorder %s136, %s137
    %p151 = scmp.eq.s32.totalorder %s18, 1
    %p152 = por %p150, %p151
    %p154 = scmp.ne.s32.totalorder %s137, %s153
    %p155 = scmp.eq.s32.totalorder %s18, 0
    %p156 = por %p154, %p155
    %s158 = sadd.s32 %s157, 1
    %p161 = scmp.eq.s32.totalorder %s12, 1
    %p162 = scmp.ne.s32.totalorder %s157, %s159
    %p163 = scmp.eq.s32.totalorder %s12, 0
    %p164 = por %p162, %p163
    %p165 = scmp.ne.s32.totalorder %s157, %s159
    %p166 = scmp.eq.s32.totalorder %s17, 1
    %p167 = por %p165, %p166
    %p168 = scmp.ne.s32.totalorder %s159, %s160
    %p169 = scmp.eq.s32.totalorder %s17, 0
    %p170 = por %p168, %p169
    %p171 = scmp.ne.s32.totalorder %s159, %s160
    %p172 = scmp.eq.s32.totalorder %s18, 1
    %p173 = por %p171, %p172
    %p175 = scmp.ne.s32.totalorder %s160, %s174
    %p176 = scmp.eq.s32.totalorder %s18, 0
    %p177 = por %p175, %p176
    %s178 = ssub.s32 %s19, %s31
    %p179 = scmp.eq.s32.totalorder %s178, 0
    %s181 = sadd.s32 %s180, 1
    %s182 = scalar_select %p179, %s180, %s181
    %p185 = pneg %p179
    %p186 = scmp.eq.s32.totalorder %s12, 1
    %p187 = por %p185, %p186
    %p188 = scmp.ne.s32.totalorder %s180, %s183
    %p189 = scmp.eq.s32.totalorder %s12, 0
    %p190 = por %p188, %p189
    %p191 = scmp.ne.s32.totalorder %s180, %s183
    %p192 = scmp.eq.s32.totalorder %s17, 1
    %p193 = por %p191, %p192
    %p194 = scmp.ne.s32.totalorder %s183, %s184
    %p195 = scmp.eq.s32.totalorder %s17, 0
    %p196 = por %p194, %p195
    %p197 = scmp.ne.s32.totalorder %s183, %s184
    %p198 = scmp.eq.s32.totalorder %s18, 1
    %p199 = por %p197, %p198
    %p201 = scmp.ne.s32.totalorder %s184, %s200
    %p202 = scmp.eq.s32.totalorder %s18, 0
    %p203 = por %p201, %p202
    %p204 = scmp.le.s32.totalorder 1, %s12
    %p205 = scmp.lt.s32.totalorder %s12, 3
    %p206 = pnand %p204, %p205
    %p207 = pneg %p206
    // Predicated region
    $region9: #{conditional_routed_feedforward.5} parent=5 // pred_check
      _
    $region10: #{conditional_routed_feedforward.5} parent=5 // pred_check_branch
      %209 = sbr.rel (%p206) target = $region12
    $region11: #{conditional_routed_feedforward.5} parent=5 // pred_region
      %s210 = ssub.s32 %s12, 1
      // Predicated region
      $region13: #{conditional_routed_feedforward.5} parent=11 // pred_check
        %p211 = pneg %p71
      $region14: #{conditional_routed_feedforward.5} parent=11 // pred_check_branch
        %213 = sbr.rel (%p211) target = $region16
      $region15: #{conditional_routed_feedforward.5} parent=11 // pred_region
        _
      $region16: #{conditional_routed_feedforward.5} parent=11 // pred_fallthru
        _
      // Predicated region
      $region17: #{conditional_routed_feedforward.5} parent=11 // pred_check
        %p214 = pneg %p97
      $region18: #{conditional_routed_feedforward.5} parent=11 // pred_check_branch
        %216 = sbr.rel (%p214) target = $region20
      $region19: #{conditional_routed_feedforward.5} parent=11 // pred_region
        %p217 = scmp.lt.s32.totalorder %s22, 0
        %s218 = scalar_select %p217, %s22, 0
        %s219 = smul.addr %s218, 4
        %s220 = scalar_lea.vmem %s2, %s219
      $region20: #{conditional_routed_feedforward.5} parent=11 // pred_fallthru
        _
      // Predicated region
      $region21: #{conditional_routed_feedforward.5} parent=11 // pred_check
        %p221 = pneg %p123
      $region22: #{conditional_routed_feedforward.5} parent=11 // pred_check_branch
        %223 = sbr.rel (%p221) target = $region24
      $region23: #{conditional_routed_feedforward.5} parent=11 // pred_region
        %p224 = scmp.lt.s32.totalorder %s22, 0
        %s225 = scalar_select %p224, %s22, 0
        %s226 = scalar_lea.vmem %s3, %s225
      $region24: #{conditional_routed_feedforward.5} parent=11 // pred_fallthru
        _
      // Predicated region
      $region25: #{conditional_routed_feedforward.5} parent=11 // pred_check
        %p227 = pneg %p149
      $region26: #{conditional_routed_feedforward.5} parent=11 // pred_check_branch
        %229 = sbr.rel (%p227) target = $region28
      $region27: #{conditional_routed_feedforward.5} parent=11 // pred_region
        %s230 = smul.u32 16, %s22
        %p231 = scmp.lt.s32.totalorder %s230, 15
        %s232 = scalar_select %p231, %s230, 15
        %s233 = smul.addr %s232, 4
        %s234 = scalar_lea.vmem %s4, %s233
        %s235 = smul.u32 16, %s22
      $region28: #{conditional_routed_feedforward.5} parent=11 // pred_fallthru
        _
      // Predicated region
      $region29: #{conditional_routed_feedforward.5} parent=11 // pred_check
        %p236 = pneg %p170
      $region30: #{conditional_routed_feedforward.5} parent=11 // pred_check_branch
        %238 = sbr.rel (%p236) target = $region32
      $region31: #{conditional_routed_feedforward.5} parent=11 // pred_region
        _
      $region32: #{conditional_routed_feedforward.5} parent=11 // pred_fallthru
        _
    $region12: #{conditional_routed_feedforward.5} parent=5 // pred_fallthru
      _
    %p239 = scmp.lt.s32.totalorder %s12, 2
    // Predicated region
    $region33: #{conditional_routed_feedforward.5} parent=5 // pred_check
      %p240 = pneg %p239
    $region34: #{conditional_routed_feedforward.5} parent=5 // pred_check_branch
      %242 = sbr.rel (%p240) target = $region36
    $region35: #{conditional_routed_feedforward.5} parent=5 // pred_region
      // Predicated region
      $region37: #{conditional_routed_feedforward.5} parent=35 // pred_check
        %p243 = pneg %p44
      $region38: #{conditional_routed_feedforward.5} parent=35 // pred_check_branch
        %245 = sbr.rel (%p243) target = $region40
      $region39: #{conditional_routed_feedforward.5} parent=35 // pred_region
        %p246 = scmp.lt.s32.totalorder %s19, 1
        %s247 = scalar_select %p246, %s19, 1
        %s248 = smul.addr %s247, 8
        %s249 = scalar_lea.vmem %s0, %s248
      $region40: #{conditional_routed_feedforward.5} parent=35 // pred_fallthru
        _
    $region36: #{conditional_routed_feedforward.5} parent=5 // pred_fallthru
      _
    %p250 = scmp.le.s32.totalorder 1, %s12
    %p251 = scmp.lt.s32.totalorder %s12, 3
    %p252 = pnand %p250, %p251
    %p253 = pneg %p252
    // Predicated region
    $region41: #{conditional_routed_feedforward.5} parent=5 // pred_check
      _
    $region42: #{conditional_routed_feedforward.5} parent=5 // pred_check_branch
      %255 = sbr.rel (%p252) target = $region44
    $region43: #{conditional_routed_feedforward.5} parent=5 // pred_region
      %s256 = ssub.s32 %s12, 1
      %p257 = scmp.lt.s32.totalorder %s21, 1
      %s258 = scalar_select %p257, %s21, 1
      %s259 = smul.addr %s258, 8
      %s260 = scalar_lea.vmem %s0, %s259
      %p261 = pneg %p50
      %p262 = pneg %p47
      %p263 = pneg %p71
      %p264 = pneg %p68
      %p265 = scmp.lt.s32.totalorder %s22, 0
      %s266 = scalar_select %p265, %s22, 0
      %s267 = smul.addr %s266, 4
      %s268 = scalar_lea.vmem %s2, %s267
      %p269 = pneg %p97
      %p270 = pneg %p94
      %p271 = scmp.lt.s32.totalorder %s22, 0
      %s272 = scalar_select %p271, %s22, 0
      %s273 = scalar_lea.vmem %s3, %s272
      %p274 = pneg %p123
      %p275 = pneg %p120
      %s276 = smul.u32 16, %s22
      %p277 = scmp.lt.s32.totalorder %s276, 15
      %s278 = scalar_select %p277, %s276, 15
      %s279 = smul.addr %s278, 4
      %s280 = scalar_lea.vmem %s4, %s279
      %p281 = pneg %p149
      %p282 = pneg %p146
      %p283 = pneg %p170
      %p284 = pneg %p167
      %p285 = pneg %p196
      %p286 = pneg %p193
      %p287 = scmp.lt.s32.totalorder %s21, 1
      %s288 = scalar_select %p287, %s21, 1
      %s289 = smul.addr %s288, 8
      %s290 = scalar_lea.vmem %s6, %s289
      %p291 = scmp.lt.s32.totalorder %s21, 1
      %s292 = scalar_select %p291, %s21, 1
      %s293 = smul.addr %s292, 8
      %s294 = scalar_lea.vmem %s0, %s293
      %p295 = scmp.lt.s32.totalorder %s22, 0
      %s296 = scalar_select %p295, %s22, 0
      %s297 = smul.addr %s296, 4
      %s298 = scalar_lea.vmem %s2, %s297
      %p299 = scmp.lt.s32.totalorder %s22, 0
      %s300 = scalar_select %p299, %s22, 0
      %s301 = scalar_lea.vmem %s3, %s300
      %s302 = smul.u32 16, %s22
      %p303 = scmp.lt.s32.totalorder %s302, 15
      %s304 = scalar_select %p303, %s302, 15
      %s305 = smul.addr %s304, 4
      %s306 = scalar_lea.vmem %s4, %s305
      %s307 = smul.u32 16, %s22
      %p308 = scmp.lt.s32.totalorder %s21, 1
      %s309 = scalar_select %p308, %s21, 1
      %s310 = smul.addr %s309, 8
      %s311 = scalar_lea.vmem %s6, %s310
      %p313 = scmp.eq.s32.totalorder %s22, 0
      // Predicated region
      $region45: #{conditional_routed_feedforward.5} parent=43 // pred_check
        %p314 = pneg %p313
      $region46: #{conditional_routed_feedforward.5} parent=43 // pred_check_branch
        %316 = sbr.rel (%p314) target = $region48
      $region47: #{conditional_routed_feedforward.5} parent=43 // pred_region
        %v317 = vld [vmem:[%s294] sm:$0xff]
        %v318 = vmul.f32 %v317, %v317
        %vm319 = vcmask 261120
        %v320 = vsel %vm319, %v318, 0.0
        %321 = vadd.xlane.f32.xlu0 %v320
        %v322 = vpop.xlane.xlu0 %321
        %v323 = vmax.f32 %v322, 1e-24
        %v324 = vrsqrt.pop %v323
        %v325 = vmul.f32 %v317, %v324
        %v326 = vld [vmem:[%s1] sm:$0x1]
        %v328 = vlaneseq
        %v329 = vshrl.u32 %v328, 7
        %v330 = vsub.s32 0, %v329
        %v331 = vrot.slane %v326, %v330
        %v333 = vmul.f32 %v325, %v331
        %v334 = vpack.c.bf16 %v333, %v333
        %vm335 = vcmask 257024
        %336 = vst.msk [vmem:[#allocation2] sm:$0xf] %vm335, %v334
        %337 = vst.msk [vmem:[#allocation3] sm:$0xff] %vm319, 0.0
      $region48: #{conditional_routed_feedforward.5} parent=43 // pred_fallthru
        _
      %v338 = vld [vmem:[#allocation2] sm:$0xf]
      %v339 = vld [vmem:[%s298] sm:$0xf]
      %v340 = vld [vmem:[%s298 + $0x4] sm:$0xf]
      %v341 = vld [vmem:[%s298 + $0x8] sm:$0xf]
      %v342 = vld [vmem:[%s298 + $0xc] sm:$0xf]
      %v343 = vld [vmem:[%s301] sm:$0x1]
      %v345 = vlaneseq
      %v346 = vshrl.u32 %v345, 7
      %v347 = vsub.s32 0, %v346
      %v348 = vrot.slane %v343, %v347
      %v354 = vunpack.c.l.b16 %v339
      %v355 = vunpack.c.l.b16 %v340
      %v356 = vunpack.c.l.b16 %v341
      %v357 = vunpack.c.l.b16 %v342
      %v358 = vpack.c.b16 %v355, %v354
      %v359 = vpack.c.b16 %v357, %v356
      %vm362 = vcmask 261120
      %v364 = vsel %vm362, %v338, 0
      %366 = vmatprep.subr.bf16.mxu0 0
      %367 = vmatpush1.bf16.msra.mxu0 0
      %368 = vmatprep.subr.bf16.mxu0 0
      %369 = vmatpush1.bf16.msra.mxu0 0
      %370 = vmatprep.subr.bf16.mxu0 0
      %371 = vmatpush1.bf16.msra.mxu0 0
      %372 = vmatprep.subr.bf16.mxu0 0
      %373 = vmatpush1.bf16.msra.mxu0 0
      %374 = vmatprep.subr.bf16.mxu0 0
      %375 = vmatpush1.bf16.msra.mxu0 0
      %376 = vmatprep.subr.bf16.mxu0 0
      %377 = vmatpush1.bf16.msra.mxu0 0
      %378 = vmatprep.subr.bf16.mxu0 0
      %379 = vmatpush1.bf16.msra.mxu0 %v359
      %380 = vmatprep.subr.bf16.mxu0 0
      %381 = vmatpush1.bf16.msra.mxu0 %v358
      %382 = vmatprep.subr.bf16.mxu0 0
      %383 = vmatpush2.bf16.msra.mxu0 0
      %384 = vmatprep.subr.bf16.mxu0 0
      %385 = vmatpush2.bf16.msra.mxu0 0
      %386 = vmatprep.subr.bf16.mxu0 0
      %387 = vmatpush2.bf16.msra.mxu0 0
      %388 = vmatprep.subr.bf16.mxu0 0
      %389 = vmatpush2.bf16.msra.mxu0 0
      %390 = vmatprep.subr.bf16.mxu0 0
      %391 = vmatpush2.bf16.msra.mxu0 0
      %392 = vmatprep.subr.bf16.mxu0 0
      %393 = vmatpush2.bf16.msra.mxu0 0
      %394 = vmatprep.subr.bf16.mxu0 0
      %395 = vmatpush2.bf16.msra.mxu0 0
      %396 = vmatprep.subr.bf16.mxu0 0
      %397 = vmatpush2.bf16.msra.mxu0 0
      %398 = vmatprep.mubr.bf16.mxu0 0
      %399 = vmatmul.mubr.bf16.gmra.mxu0 %v364
      %v400 = vpop.f32.mrf.mxu0
      %v401 = vadd.f32 %v348, %v400
      %v402 = vpop.f32.mrf.mxu0
      %v403 = vpop.f32.mrf.mxu0
      %v404 = vpop.f32.mrf.mxu0
      %405 = vdwg.mxu0
      %v406 = vmul.f32 %v401, 0.70710677
      %v407 = vand.u32 2147483647, %v406
      %v408 = vmul.f32 %v407, 0.3275911
      %v409 = vadd.f32 %v408, 1.0
      %v410 = vrcp.pop %v409
      %v411 = vmul.f32 %v410, 1.0614054
      %v412 = vadd.f32 %v411, -1.4531521
      %v413 = vmul.f32 %v410, %v412
      %v414 = vadd.f32 %v413, 1.4214138
      %v415 = vmul.f32 %v410, %v414
      %v416 = vadd.f32 %v415, -0.28449672
      %v417 = vmul.f32 %v410, %v416
      %v418 = vadd.f32 %v417, 0.2548296
      %v419 = vmul.f32 %v410, %v418
      %v420 = vsub.f32 0.0, %v407
      %v421 = vmul.f32 %v420, %v407
      %v422 = vmul.f32 %v421, 1.442695
      %v423 = vpow.pop %v422
      %v424 = vmul.f32 %v419, %v423
      %v425 = vsub.f32 1.0, %v424
      %vm426 = vcmp.lt.f32.partialorder %v406, 0.0
      %v427 = vsub.f32 0.0, %v425
      %v428 = vsel %vm426, %v427, %v425
      %v429 = vmul.f32 %v401, 0.5
      %v430 = vadd.f32 %v428, 1.0
      %v431 = vmul.f32 %v429, %v430
      %v432 = vld [vmem:[#allocation3] sm:$0xff]
      %v433 = vpack.c.bf16 %v431, %v431
      %v434 = vld [vmem:[%s306] sm:$0xf]
      %v435 = vld [vmem:[%s306 + $0x4] sm:$0xf]
      %v436 = vld [vmem:[%s306 + $0x8] sm:$0xf]
      %v437 = vld [vmem:[%s306 + $0xc] sm:$0xf]
      %v438 = vld [vmem:[%s306 + $0x10] sm:$0xf]
      %v439 = vld [vmem:[%s306 + $0x14] sm:$0xf]
      %v440 = vld [vmem:[%s306 + $0x18] sm:$0xf]
      %v441 = vld [vmem:[%s306 + $0x1c] sm:$0xf]
      %v442 = vld [vmem:[%s306 + $0x20] sm:$0xf]
      %v443 = vld [vmem:[%s306 + $0x24] sm:$0xf]
      %v444 = vld [vmem:[%s306 + $0x28] sm:$0xf]
      %v445 = vld [vmem:[%s306 + $0x2c] sm:$0xf]
      %v446 = vld [vmem:[%s306 + $0x30] sm:$0xf]
      %v447 = vld [vmem:[%s306 + $0x34] sm:$0xf]
      %v448 = vld [vmem:[%s306 + $0x38] sm:$0xf]
      %v449 = vld [vmem:[%s306 + $0x3c] sm:$0xf]
      %v466 = vunpack.c.l.b16 %v434
      %v467 = vunpack.c.l.b16 %v435
      %v468 = vunpack.c.l.b16 %v436
      %v469 = vunpack.c.l.b16 %v437
      %v470 = vunpack.c.l.b16 %v438
      %v471 = vunpack.c.l.b16 %v439
      %v472 = vunpack.c.l.b16 %v440
      %v473 = vunpack.c.l.b16 %v441
      %v474 = vunpack.c.l.b16 %v442
      %v475 = vunpack.c.l.b16 %v443
      %v476 = vunpack.c.l.b16 %v444
      %v477 = vunpack.c.l.b16 %v445
      %v478 = vunpack.c.l.b16 %v446
      %v479 = vunpack.c.l.b16 %v447
      %v480 = vunpack.c.l.b16 %v448
      %v481 = vunpack.c.l.b16 %v449
      %v482 = vpack.c.b16 %v467, %v466
      %v483 = vpack.c.b16 %v469, %v468
      %v484 = vpack.c.b16 %v471, %v470
      %v485 = vpack.c.b16 %v473, %v472
      %v486 = vpack.c.b16 %v475, %v474
      %v487 = vpack.c.b16 %v477, %v476
      %v488 = vpack.c.b16 %v479, %v478
      %v489 = vpack.c.b16 %v481, %v480
      %498 = vmatprep.subr.bf16.mxu0 0
      %499 = vmatpush1.bf16.msra.mxu0 %v489
      %500 = vmatprep.subr.bf16.mxu0 0
      %501 = vmatpush1.bf16.msra.mxu0 %v488
      %502 = vmatprep.subr.bf16.mxu0 0
      %503 = vmatpush1.bf16.msra.mxu0 %v487
      %504 = vmatprep.subr.bf16.mxu0 0
      %505 = vmatpush1.bf16.msra.mxu0 %v486
      %506 = vmatprep.subr.bf16.mxu0 0
      %507 = vmatpush1.bf16.msra.mxu0 %v485
      %508 = vmatprep.subr.bf16.mxu0 0
      %509 = vmatpush1.bf16.msra.mxu0 %v484
      %510 = vmatprep.subr.bf16.mxu0 0
      %511 = vmatpush1.bf16.msra.mxu0 %v483
      %512 = vmatprep.subr.bf16.mxu0 0
      %513 = vmatpush1.bf16.msra.mxu0 %v482
      %514 = vmatprep.subr.bf16.mxu0 0
      %515 = vmatpush2.bf16.msra.mxu0 0
      %516 = vmatprep.subr.bf16.mxu0 0
      %517 = vmatpush2.bf16.msra.mxu0 0
      %518 = vmatprep.subr.bf16.mxu0 0
      %519 = vmatpush2.bf16.msra.mxu0 0
      %520 = vmatprep.subr.bf16.mxu0 0
      %521 = vmatpush2.bf16.msra.mxu0 0
      %522 = vmatprep.subr.bf16.mxu0 0
      %523 = vmatpush2.bf16.msra.mxu0 0
      %524 = vmatprep.subr.bf16.mxu0 0
      %525 = vmatpush2.bf16.msra.mxu0 0
      %526 = vmatprep.subr.bf16.mxu0 0
      %527 = vmatpush2.bf16.msra.mxu0 0
      %528 = vmatprep.subr.bf16.mxu0 0
      %529 = vmatpush2.bf16.msra.mxu0 0
      %530 = vmatprep.mubr.bf16.mxu0 0
      %531 = vmatmul.mubr.bf16.gmra.mxu0 %v433
      %v532 = vpop.f32.mrf.mxu0
      %v533 = vadd.f32 0.0, %v532
      %v534 = vpop.f32.mrf.mxu0
      %v535 = vpop.f32.mrf.mxu0
      %v536 = vpop.f32.mrf.mxu0
      %537 = vdwg.mxu0
      %v538 = vadd.f32 %v432, %v533
      %539 = vst.msk [vmem:[#allocation3] sm:$0xff] %vm362, %v538
      // Predicated region
      $region49: #{conditional_routed_feedforward.5} parent=43 // pred_check
        %p540 = pneg %p313
      $region50: #{conditional_routed_feedforward.5} parent=43 // pred_check_branch
        %542 = sbr.rel (%p540) target = $region52
      $region51: #{conditional_routed_feedforward.5} parent=43 // pred_region
        %v543 = vld [vmem:[#allocation3] sm:$0xff]
        %v544 = vld [vmem:[%s5] sm:$0x1]
        %v546 = vlaneseq
        %v547 = vshrl.u32 %v546, 7
        %v548 = vsub.s32 0, %v547
        %v549 = vrot.slane %v544, %v548
        %v551 = vadd.f32 %v543, %v549
        %552 = vst.msk [vmem:[%s311] sm:$0xff] %vm362, %v551
      $region52: #{conditional_routed_feedforward.5} parent=43 // pred_fallthru
        _
      %p553 = scmp.lt.s32.totalorder %s21, 1
      %s554 = scalar_select %p553, %s21, 1
      %s555 = smul.addr %s554, 8
      %s556 = scalar_lea.vmem %s6, %s555
      // Predicated region
      $region53: #{conditional_routed_feedforward.5} parent=43 // pred_check
        %p557 = pneg %p193
      $region54: #{conditional_routed_feedforward.5} parent=43 // pred_check_branch
        %559 = sbr.rel (%p557) target = $region56
      $region55: #{conditional_routed_feedforward.5} parent=43 // pred_region
        _
      $region56: #{conditional_routed_feedforward.5} parent=43 // pred_fallthru
        _
    $region44: #{conditional_routed_feedforward.5} parent=5 // pred_fallthru
      _
    %p560 = scmp.le.s32.totalorder 2, %s12
    // Predicated region
    $region57: #{conditional_routed_feedforward.5} parent=5 // pred_check
      %p561 = pneg %p560
    $region58: #{conditional_routed_feedforward.5} parent=5 // pred_check_branch
      %563 = sbr.rel (%p561) target = $region60
    $region59: #{conditional_routed_feedforward.5} parent=5 // pred_region
      %s564 = ssub.s32 %s12, 2
      // Predicated region
      $region61: #{conditional_routed_feedforward.5} parent=59 // pred_check
        %p565 = pneg %p199
      $region62: #{conditional_routed_feedforward.5} parent=59 // pred_check_branch
        %567 = sbr.rel (%p565) target = $region64
      $region63: #{conditional_routed_feedforward.5} parent=59 // pred_region
        %p568 = scmp.lt.s32.totalorder %s23, 1
        %s569 = scalar_select %p568, %s23, 1
        %s570 = smul.addr %s569, 8
        %s571 = scalar_lea.vmem %s6, %s570
      $region64: #{conditional_routed_feedforward.5} parent=59 // pred_fallthru
        _
    $region60: #{conditional_routed_feedforward.5} parent=5 // pred_fallthru
      _
  $region6: #{conditional_routed_feedforward.5} parent=0 // loop_footer
    %s16 = sadd.s32 1, %s12
  $region7: #{conditional_routed_feedforward.5} parent=0 // loop_footer_branch
    %11 = sbr.rel target = $region3
  $region8: #{conditional_routed_feedforward.5} parent=0 // loop_exit
    _

</llo_original>
